<compile_context>
chip_gen: v7x
topology: tpu7x:2x2x1
jax: 0.10.0
libtpu: 0.0.40
codegen_flags: <defaults>
</compile_context>

<pallas_src>
import jax
import jax.numpy as jnp
from jax.experimental import pallas as pl
from jax.experimental.pallas import tpu as pltpu

IN_F = 784       # true input width (block dim == array dim, no padding)
H4_PAD = 128     # layer-4 output 64 padded to 128 (lane-dense, tiny FLOP cost)
OUT_PAD = 128    # final output 10 padded to 128 (lane-dense stores)


def mlp_kernel(x_ref,
               w1_ref, b1_ref,
               w2_ref, b2_ref,
               w3_ref, b3_ref,
               w4_ref, b4_ref,
               w5_ref, b5_ref,
               o_ref):
    # Activations travel in bf16; accumulation stays f32 on the MXU.
    h = x_ref[...]                                                # (TM, 784) bf16

    h = jnp.dot(h, w1_ref[...], preferred_element_type=jnp.float32) + b1_ref[...]
    h = jnp.maximum(h, 0.0).astype(jnp.bfloat16)

    h = jnp.dot(h, w2_ref[...], preferred_element_type=jnp.float32) + b2_ref[...]
    h = jnp.maximum(h, 0.0).astype(jnp.bfloat16)

    h = jnp.dot(h, w3_ref[...], preferred_element_type=jnp.float32) + b3_ref[...]
    h = jnp.maximum(h, 0.0).astype(jnp.bfloat16)

    h = jnp.dot(h, w4_ref[...], preferred_element_type=jnp.float32) + b4_ref[...]
    h = jnp.maximum(h, 0.0).astype(jnp.bfloat16)

    h = jnp.dot(h, w5_ref[...], preferred_element_type=jnp.float32) + b5_ref[...]
    o_ref[...] = h.astype(jnp.bfloat16)                           # (TM, 128) bf16


def _round_up(x, m):
    return ((x + m - 1) // m) * m


def _choose_tile(batch, max_tile=512):
    """Pick a batch tile balancing padded-row waste, per-step overhead and
    (on v7x) having >=2 grid steps so both TensorCores get work."""
    if batch <= 64:
        return max(16, _round_up(batch, 16))        # one small tile (bf16 sublane pack)
    cands = [t for t in (64, 128, 256, 512, 1024) if t <= max_tile] or [64]

    def key(t):
        steps = -(-batch // t)
        waste = steps * t - batch
        low_waste = waste * 8 <= batch              # <=12.5% padded rows
        return (not low_waste,                      # 1st: keep waste small
                0 if low_waste else waste,          # 2nd: min waste if over budget
                0 if steps >= 2 else 1,             # 3rd: prefer >=2 steps (v7x 2 TCs)
                -t)                                 # 4th: bigger tiles (fewer steps)

    return min(cands, key=key)


def init_linear(key, in_f, out_f):
    # Matches nn.Linear default init: U(-1/sqrt(in_f), 1/sqrt(in_f)).
    kw, kb = jax.random.split(key)
    bound = 1.0 / (in_f ** 0.5)
    w = jax.random.uniform(kw, (in_f, out_f), jnp.float32, -bound, bound)
    b = jax.random.uniform(kb, (1, out_f), jnp.float32, -bound, bound)
    return w, b


def prepare_params(params_f32):
    """bf16 weights / f32 biases, zero-padded only where it keeps stores lane-dense."""
    (w1, b1), (w2, b2), (w3, b3), (w4, b4), (w5, b5) = params_f32

    def pad_cols(a, cols):
        return jnp.pad(a, ((0, 0), (0, cols - a.shape[1])))

    def pad_rows(a, rows):
        return jnp.pad(a, ((0, rows - a.shape[0]), (0, 0)))

    w1p = w1.astype(jnp.bfloat16)                                    # (784, 512)
    w2p = w2.astype(jnp.bfloat16)                                    # (512, 256)
    w3p = w3.astype(jnp.bfloat16)                                    # (256, 128)
    w4p = pad_cols(w4, H4_PAD).astype(jnp.bfloat16)                  # (128, 128)
    w5p = pad_cols(pad_rows(w5, H4_PAD), OUT_PAD).astype(jnp.bfloat16)  # (128, 128)

    b1p = b1.astype(jnp.float32)
    b2p = b2.astype(jnp.float32)
    b3p = b3.astype(jnp.float32)
    b4p = pad_cols(b4, H4_PAD).astype(jnp.float32)
    b5p = pad_cols(b5, OUT_PAD).astype(jnp.float32)

    return (w1p, b1p, w2p, b2p, w3p, b3p, w4p, b4p, w5p, b5p)


def net_forward(x, padded_params, *, max_tile=512):
    """x: any shape flattening to (-1, 784). Returns (batch, 10) float32."""
    x2d = x.reshape(-1, IN_F)
    batch = x2d.shape[0]

    tm = _choose_tile(batch, max_tile)
    steps = max(1, -(-batch // tm))          # guard batch == 0
    pad_batch = steps * tm

    xb = x2d.astype(jnp.bfloat16)
    if pad_batch != batch:                   # row-only pad, skipped when aligned
        xb = jnp.pad(xb, ((0, pad_batch - batch), (0, 0)))

    w1, b1, w2, b2, w3, b3, w4, b4, w5, b5 = padded_params

    flops = 2 * pad_batch * (IN_F * 512 + 512 * 256 + 256 * 128
                             + 128 * H4_PAD + H4_PAD * OUT_PAD)
    bytes_accessed = (sum(int(a.size) * a.dtype.itemsize for a in padded_params)
                      + int(xb.size) * 2 + pad_batch * OUT_PAD * 2)

    def build(use_buffering):
        def resident(a):
            # Constant index_map: DMA'd once, stays resident in VMEM.
            if use_buffering:
                return pl.BlockSpec(a.shape, lambda i: (0, 0),
                                    pipeline_mode=pl.Buffered(1))
            return pl.BlockSpec(a.shape, lambda i: (0, 0))

        if use_buffering:
            x_spec = pl.BlockSpec((tm, IN_F), lambda i: (i, 0),
                                  pipeline_mode=pl.Buffered(3))
        else:
            x_spec = pl.BlockSpec((tm, IN_F), lambda i: (i, 0))

        return pl.pallas_call(
            mlp_kernel,
            out_shape=jax.ShapeDtypeStruct((pad_batch, OUT_PAD), jnp.bfloat16),
            grid=(steps,),
            in_specs=[
                x_spec,
                resident(w1), resident(b1),
                resident(w2), resident(b2),
                resident(w3), resident(b3),
                resident(w4), resident(b4),
                resident(w5), resident(b5),
            ],
            out_specs=pl.BlockSpec((tm, OUT_PAD), lambda i: (i, 0)),
            compiler_params=pltpu.CompilerParams(
                dimension_semantics=("parallel",)),
            cost_estimate=pl.CostEstimate(
                flops=flops, transcendentals=0, bytes_accessed=bytes_accessed),
        )

    args = (xb, w1, b1, w2, b2, w3, b3, w4, b4, w5, b5)
    try:
        out = build(use_buffering=True)(*args)
    except Exception:
        # Installed JAX may not accept pipeline_mode on pallas_call BlockSpecs;
        # default double-buffering is correct and nearly as fast here.
        out = build(use_buffering=False)(*args)

    # Drop padded batch rows / output lanes; return f32 logits like the PyTorch net.
    return out[:batch, :10].astype(jnp.float32)


if __name__ == "__main__":
    key = jax.random.PRNGKey(0)
    k_x, k1, k2, k3, k4, k5 = jax.random.split(key, 6)

    params = (
        init_linear(k1, 784, 512),
        init_linear(k2, 512, 256),
        init_linear(k3, 256, 128),
        init_linear(k4, 128, 64),
        init_linear(k5, 64, 10),
    )
    padded_params = prepare_params(params)

    # Small MNIST-like input: (batch=2, channels=1, 28, 28) -> view(-1, 784).
    x = jax.random.normal(k_x, (2, 1, 28, 28), jnp.float32)

    out = net_forward(x, padded_params)
    jax.block_until_ready(out)

    # Pure-JAX reference with the same bf16 weight/activation quantization.
    h = x.reshape(-1, 784).astype(jnp.bfloat16)
    for (w, b) in params[:-1]:
        z = jnp.dot(h, w.astype(jnp.bfloat16),
                    preferred_element_type=jnp.float32) + b
        h = jnp.maximum(z, 0.0).astype(jnp.bfloat16)
    w5, b5 = params[-1]
    ref = jnp.dot(h, w5.astype(jnp.bfloat16),
                  preferred_element_type=jnp.float32) + b5

    assert out.shape == (2, 10)
    assert jnp.allclose(out, ref, atol=5e-2, rtol=5e-2), \
        float(jnp.max(jnp.abs(out - ref)))

    print("KERNEL_OK")
</pallas_src>

<mosaic_0001>
module attributes {stable_mosaic.version = 11 : i64} {
  func.func @mlp_kernel(%arg0: i32, %arg1: memref<16x784xbf16, #tpu.memory_space<vmem>>, %arg2: memref<784x512xbf16, #tpu.memory_space<vmem>>, %arg3: memref<1x512xf32, #tpu.memory_space<vmem>>, %arg4: memref<512x256xbf16, #tpu.memory_space<vmem>>, %arg5: memref<1x256xf32, #tpu.memory_space<vmem>>, %arg6: memref<256x128xbf16, #tpu.memory_space<vmem>>, %arg7: memref<1x128xf32, #tpu.memory_space<vmem>>, %arg8: memref<128x128xbf16, #tpu.memory_space<vmem>>, %arg9: memref<1x128xf32, #tpu.memory_space<vmem>>, %arg10: memref<128x128xbf16, #tpu.memory_space<vmem>>, %arg11: memref<1x128xf32, #tpu.memory_space<vmem>>, %arg12: memref<16x128xbf16, #tpu.memory_space<vmem>>) attributes {dimension_semantics = [#tpu.dimension_semantics<parallel>], iteration_bounds = array<i64: 1>, scalar_prefetch = 0 : i64, scratch_operands = 0 : i64, tpu.core_type = #tpu.core_type<tc>, window_params = [{transform_indices = @transform_0, window_bounds = array<i64: 16, 784>}, {pipeline_mode = #tpu.pipeline_mode<synchronous>, transform_indices = @transform_1, window_bounds = array<i64: 784, 512>}, {pipeline_mode = #tpu.pipeline_mode<synchronous>, transform_indices = @transform_2, window_bounds = array<i64: 1, 512>}, {pipeline_mode = #tpu.pipeline_mode<synchronous>, transform_indices = @transform_3, window_bounds = array<i64: 512, 256>}, {pipeline_mode = #tpu.pipeline_mode<synchronous>, transform_indices = @transform_4, window_bounds = array<i64: 1, 256>}, {pipeline_mode = #tpu.pipeline_mode<synchronous>, transform_indices = @transform_5, window_bounds = array<i64: 256, 128>}, {pipeline_mode = #tpu.pipeline_mode<synchronous>, transform_indices = @transform_6, window_bounds = array<i64: 1, 128>}, {pipeline_mode = #tpu.pipeline_mode<synchronous>, transform_indices = @transform_7, window_bounds = array<i64: 128, 128>}, {pipeline_mode = #tpu.pipeline_mode<synchronous>, transform_indices = @transform_8, window_bounds = array<i64: 1, 128>}, {pipeline_mode = #tpu.pipeline_mode<synchronous>, transform_indices = @transform_9, window_bounds = array<i64: 128, 128>}, {pipeline_mode = #tpu.pipeline_mode<synchronous>, transform_indices = @transform_10, window_bounds = array<i64: 1, 128>}, {transform_indices = @transform_11, window_bounds = array<i64: 16, 128>}]} {
    %c0 = arith.constant 0 : index
    %c0_0 = arith.constant 0 : index
    %0 = vector.load %arg1[%c0, %c0_0] : memref<16x784xbf16, #tpu.memory_space<vmem>>, vector<16x784xbf16>
    %c0_1 = arith.constant 0 : index
    %c0_2 = arith.constant 0 : index
    %1 = vector.load %arg2[%c0_1, %c0_2] : memref<784x512xbf16, #tpu.memory_space<vmem>>, vector<784x512xbf16>
    %cst = arith.constant dense<0.000000e+00> : vector<16x512xf32>
    %2 = tpu.matmul %0, %1, %cst {dimension_numbers = #tpu.dot_dimension_numbers<[1], [0], [0], [1], [0, 0, 1, 1], [], []>} : vector<16x784xbf16>, vector<784x512xbf16>, vector<16x512xf32> -> vector<16x512xf32>
    %c0_3 = arith.constant 0 : index
    %c0_4 = arith.constant 0 : index
    %3 = vector.load %arg3[%c0_3, %c0_4] : memref<1x512xf32, #tpu.memory_space<vmem>>, vector<1x512xf32>
    %4 = vector.broadcast %3 : vector<1x512xf32> to vector<16x512xf32>
    %5 = arith.addf %2, %4 : vector<16x512xf32>
    %cst_5 = arith.constant 0.000000e+00 : f32
    %6 = vector.broadcast %cst_5 : f32 to vector<16x512xf32>
    %7 = arith.maximumf %5, %6 : vector<16x512xf32>
    %8 = arith.truncf %7 : vector<16x512xf32> to vector<16x512xbf16>
    %c0_6 = arith.constant 0 : index
    %c0_7 = arith.constant 0 : index
    %9 = vector.load %arg4[%c0_6, %c0_7] : memref<512x256xbf16, #tpu.memory_space<vmem>>, vector<512x256xbf16>
    %cst_8 = arith.constant dense<0.000000e+00> : vector<16x256xf32>
    %10 = tpu.matmul %8, %9, %cst_8 {dimension_numbers = #tpu.dot_dimension_numbers<[1], [0], [0], [1], [0, 0, 1, 1], [], []>} : vector<16x512xbf16>, vector<512x256xbf16>, vector<16x256xf32> -> vector<16x256xf32>
    %c0_9 = arith.constant 0 : index
    %c0_10 = arith.constant 0 : index
    %11 = vector.load %arg5[%c0_9, %c0_10] : memref<1x256xf32, #tpu.memory_space<vmem>>, vector<1x256xf32>
    %12 = vector.broadcast %11 : vector<1x256xf32> to vector<16x256xf32>
    %13 = arith.addf %10, %12 : vector<16x256xf32>
    %cst_11 = arith.constant 0.000000e+00 : f32
    %14 = vector.broadcast %cst_11 : f32 to vector<16x256xf32>
    %15 = arith.maximumf %13, %14 : vector<16x256xf32>
    %16 = arith.truncf %15 : vector<16x256xf32> to vector<16x256xbf16>
    %c0_12 = arith.constant 0 : index
    %c0_13 = arith.constant 0 : index
    %17 = vector.load %arg6[%c0_12, %c0_13] : memref<256x128xbf16, #tpu.memory_space<vmem>>, vector<256x128xbf16>
    %cst_14 = arith.constant dense<0.000000e+00> : vector<16x128xf32>
    %18 = tpu.matmul %16, %17, %cst_14 {dimension_numbers = #tpu.dot_dimension_numbers<[1], [0], [0], [1], [0, 0, 1, 1], [], []>} : vector<16x256xbf16>, vector<256x128xbf16>, vector<16x128xf32> -> vector<16x128xf32>
    %c0_15 = arith.constant 0 : index
    %c0_16 = arith.constant 0 : index
    %19 = vector.load %arg7[%c0_15, %c0_16] : memref<1x128xf32, #tpu.memory_space<vmem>>, vector<1x128xf32>
    %20 = vector.broadcast %19 : vector<1x128xf32> to vector<16x128xf32>
    %21 = arith.addf %18, %20 : vector<16x128xf32>
    %cst_17 = arith.constant 0.000000e+00 : f32
    %22 = vector.broadcast %cst_17 : f32 to vector<16x128xf32>
    %23 = arith.maximumf %21, %22 : vector<16x128xf32>
    %24 = arith.truncf %23 : vector<16x128xf32> to vector<16x128xbf16>
    %c0_18 = arith.constant 0 : index
    %c0_19 = arith.constant 0 : index
    %25 = vector.load %arg8[%c0_18, %c0_19] : memref<128x128xbf16, #tpu.memory_space<vmem>>, vector<128x128xbf16>
    %cst_20 = arith.constant dense<0.000000e+00> : vector<16x128xf32>
    %26 = tpu.matmul %24, %25, %cst_20 {dimension_numbers = #tpu.dot_dimension_numbers<[1], [0], [0], [1], [0, 0, 1, 1], [], []>} : vector<16x128xbf16>, vector<128x128xbf16>, vector<16x128xf32> -> vector<16x128xf32>
    %c0_21 = arith.constant 0 : index
    %c0_22 = arith.constant 0 : index
    %27 = vector.load %arg9[%c0_21, %c0_22] : memref<1x128xf32, #tpu.memory_space<vmem>>, vector<1x128xf32>
    %28 = vector.broadcast %27 : vector<1x128xf32> to vector<16x128xf32>
    %29 = arith.addf %26, %28 : vector<16x128xf32>
    %cst_23 = arith.constant 0.000000e+00 : f32
    %30 = vector.broadcast %cst_23 : f32 to vector<16x128xf32>
    %31 = arith.maximumf %29, %30 : vector<16x128xf32>
    %32 = arith.truncf %31 : vector<16x128xf32> to vector<16x128xbf16>
    %c0_24 = arith.constant 0 : index
    %c0_25 = arith.constant 0 : index
    %33 = vector.load %arg10[%c0_24, %c0_25] : memref<128x128xbf16, #tpu.memory_space<vmem>>, vector<128x128xbf16>
    %cst_26 = arith.constant dense<0.000000e+00> : vector<16x128xf32>
    %34 = tpu.matmul %32, %33, %cst_26 {dimension_numbers = #tpu.dot_dimension_numbers<[1], [0], [0], [1], [0, 0, 1, 1], [], []>} : vector<16x128xbf16>, vector<128x128xbf16>, vector<16x128xf32> -> vector<16x128xf32>
    %c0_27 = arith.constant 0 : index
    %c0_28 = arith.constant 0 : index
    %35 = vector.load %arg11[%c0_27, %c0_28] : memref<1x128xf32, #tpu.memory_space<vmem>>, vector<1x128xf32>
    %36 = vector.broadcast %35 : vector<1x128xf32> to vector<16x128xf32>
    %37 = arith.addf %34, %36 : vector<16x128xf32>
    %38 = arith.truncf %37 : vector<16x128xf32> to vector<16x128xbf16>
    %c0_29 = arith.constant 0 : index
    %c0_30 = arith.constant 0 : index
    %39 = vector.load %arg12[%c0_29, %c0_30] : memref<16x128xbf16, #tpu.memory_space<vmem>>, vector<16x128xbf16>
    tpu.vector_store %arg12[%c0_29, %c0_30], %38 {strides = array<i32>} : memref<16x128xbf16, #tpu.memory_space<vmem>>, vector<16x128xbf16>,
    return
  }
  func.func @transform_0(%arg0: i32) -> (i32, i32) {
    %c0_i32 = arith.constant 0 : i32
    %c0_i32_0 = arith.constant 0 : i32
    return %arg0, %c0_i32 : i32, i32
  }
  func.func @transform_1(%arg0: i32) -> (i32, i32) {
    %c0_i32 = arith.constant 0 : i32
    %c0_i32_0 = arith.constant 0 : i32
    %c0_i32_1 = arith.constant 0 : i32
    return %c0_i32, %c0_i32_0 : i32, i32
  }
  func.func @transform_2(%arg0: i32) -> (i32, i32) {
    %c0_i32 = arith.constant 0 : i32
    %c0_i32_0 = arith.constant 0 : i32
    %c0_i32_1 = arith.constant 0 : i32
    return %c0_i32, %c0_i32_0 : i32, i32
  }
  func.func @transform_3(%arg0: i32) -> (i32, i32) {
    %c0_i32 = arith.constant 0 : i32
    %c0_i32_0 = arith.constant 0 : i32
    %c0_i32_1 = arith.constant 0 : i32
    return %c0_i32, %c0_i32_0 : i32, i32
  }
  func.func @transform_4(%arg0: i32) -> (i32, i32) {
    %c0_i32 = arith.constant 0 : i32
    %c0_i32_0 = arith.constant 0 : i32
    %c0_i32_1 = arith.constant 0 : i32
    return %c0_i32, %c0_i32_0 : i32, i32
  }
  func.func @transform_5(%arg0: i32) -> (i32, i32) {
    %c0_i32 = arith.constant 0 : i32
    %c0_i32_0 = arith.constant 0 : i32
    %c0_i32_1 = arith.constant 0 : i32
    return %c0_i32, %c0_i32_0 : i32, i32
  }
  func.func @transform_6(%arg0: i32) -> (i32, i32) {
    %c0_i32 = arith.constant 0 : i32
    %c0_i32_0 = arith.constant 0 : i32
    %c0_i32_1 = arith.constant 0 : i32
    return %c0_i32, %c0_i32_0 : i32, i32
  }
  func.func @transform_7(%arg0: i32) -> (i32, i32) {
    %c0_i32 = arith.constant 0 : i32
    %c0_i32_0 = arith.constant 0 : i32
    %c0_i32_1 = arith.constant 0 : i32
    return %c0_i32, %c0_i32_0 : i32, i32
  }
  func.func @transform_8(%arg0: i32) -> (i32, i32) {
    %c0_i32 = arith.constant 0 : i32
    %c0_i32_0 = arith.constant 0 : i32
    %c0_i32_1 = arith.constant 0 : i32
    return %c0_i32, %c0_i32_0 : i32, i32
  }
  func.func @transform_9(%arg0: i32) -> (i32, i32) {
    %c0_i32 = arith.constant 0 : i32
    %c0_i32_0 = arith.constant 0 : i32
    %c0_i32_1 = arith.constant 0 : i32
    return %c0_i32, %c0_i32_0 : i32, i32
  }
  func.func @transform_10(%arg0: i32) -> (i32, i32) {
    %c0_i32 = arith.constant 0 : i32
    %c0_i32_0 = arith.constant 0 : i32
    %c0_i32_1 = arith.constant 0 : i32
    return %c0_i32, %c0_i32_0 : i32, i32
  }
  func.func @transform_11(%arg0: i32) -> (i32, i32) {
    %c0_i32 = arith.constant 0 : i32
    %c0_i32_0 = arith.constant 0 : i32
    return %arg0, %c0_i32 : i32, i32
  }
}

</mosaic_0001>

<llo_original>
// kernel: tpu_custom_call.1
$region0: #{tpu_custom_call.1}
  #allocation0 [shape = 'u32[]', space=smem, size = 0x4, offset = 0x4, fixed_abs, tag = 'smem constant byte address 0x4 - core index']
  #allocation1 [shape = 'u32[144,128]{1,0:T(1,128)}', space=vmem, size = 0x12000, scoped, tag = 'internal scratch']
  %s0 = inlined_call_operand.hbm [shape: bf16[16,784], index: 0, kind: input, shape index: {}]
  %s1 = inlined_call_operand.hbm [shape: bf16[784,512], index: 1, kind: input, shape index: {}]
  %s2 = inlined_call_operand.vmem [shape: f32[1,512], index: 2, kind: input, shape index: {}]
  %s3 = inlined_call_operand.hbm [shape: bf16[512,256], index: 3, kind: input, shape index: {}]
  %s4 = inlined_call_operand.vmem [shape: f32[1,256], index: 4, kind: input, shape index: {}]
  %s5 = inlined_call_operand.hbm [shape: bf16[256,128], index: 5, kind: input, shape index: {}]
  %s6 = inlined_call_operand.vmem [shape: f32[1,128], index: 6, kind: input, shape index: {}]
  %s7 = inlined_call_operand.hbm [shape: bf16[128,128], index: 7, kind: input, shape index: {}]
  %s8 = inlined_call_operand.vmem [shape: f32[1,128], index: 8, kind: input, shape index: {}]
  %s9 = inlined_call_operand.hbm [shape: bf16[128,128], index: 9, kind: input, shape index: {}]
  %s10 = inlined_call_operand.vmem [shape: f32[1,128], index: 10, kind: input, shape index: {}]
  %s11 = inlined_call_operand.hbm [shape: bf16[16,128], index: 11, kind: output, shape index: {}]
  %s12 = sld [smem:[#allocation0]]
  $region78: #{tpu_custom_call.1} parent=0
    _
  %s14 = ssub.s32 1, %s12
  %s15 = scalar_select 0, %s14, %s12
  $region1: #{tpu_custom_call.1} parent=0
    #allocation2 [shape = 'u8[28672]{0}', space=vmem, size = 0x7000, scoped, tag = 'input window, operand 0, single buffered']
    #allocation3 [shape = 's32[1]{0}', space=sflag, size = 0x4, scoped, tag = 'scoped memory for tpu_custom_call.1']
    #allocation4 [shape = 's32[1]{0}', space=sflag, size = 0x4, scoped, tag = 'scoped memory for tpu_custom_call.1']
    #allocation5 [shape = 'u8[802816]{0}', space=vmem, size = 0xc4000, scoped, tag = 'input window, operand 1, single buffered']
    #allocation6 [shape = 's32[1]{0}', space=sflag, size = 0x4, scoped, tag = 'scoped memory for tpu_custom_call.1']
    #allocation7 [shape = 'u8[262144]{0}', space=vmem, size = 0x40000, scoped, tag = 'input window, operand 3, single buffered']
    #allocation8 [shape = 'u8[65536]{0}', space=vmem, size = 0x10000, scoped, tag = 'input window, operand 5, single buffered']
    #allocation9 [shape = 's32[1]{0}', space=sflag, size = 0x4, scoped, tag = 'scoped memory for tpu_custom_call.1']
    #allocation10 [shape = 'u8[32768]{0}', space=vmem, size = 0x8000, scoped, tag = 'input window, operand 7, single buffered']
    #allocation11 [shape = 'u8[32768]{0}', space=vmem, size = 0x8000, scoped, tag = 'input window, operand 9, single buffered']
    #allocation12 [shape = 's32[1]{0}', space=sflag, size = 0x4, scoped, tag = 'scoped memory for tpu_custom_call.1']
    #allocation13 [shape = 'u8[4096]{0}', space=vmem, size = 0x1000, scoped, tag = 'output window, operand 0, single buffered']
    %16 = vsyncpa [#allocation3], 0
    %17 = vsyncpa [#allocation6], 0
    %18 = vsyncpa [#allocation9], 0
    %19 = vsyncpa [#allocation12], 0
    %20 = vsyncpa [#allocation4], 0
    // Predicated region
    $region2: #{tpu_custom_call.1} parent=1 // pred_check
      _
    $region3: #{tpu_custom_call.1} parent=1 // pred_check_branch
      %22 = sbr.rel (0) target = $region5
    $region4: #{tpu_custom_call.1} parent=1 // pred_region
      %s24 = ssub.s32 896, 896
      %25 = vsyncadd [#allocation3], %s24
      %s26 = sshll.u32 [#allocation2], 4
      %s27 = int_to_ptr.vmem [resolvable:$true] %s26
      %32 = dma.hbm_to_vmem [thread:$0]  %s0, 896, %s27, [#allocation3], 448, 448, 28
    $region5: #{tpu_custom_call.1} parent=1 // pred_fallthru
      _
    // Predicated region
    $region6: #{tpu_custom_call.1} parent=1 // pred_check
      _
    $region7: #{tpu_custom_call.1} parent=1 // pred_check_branch
      %34 = sbr.rel (0) target = $region9
    $region8: #{tpu_custom_call.1} parent=1 // pred_region
      %s36 = ssub.s32 25088, 25088
      %37 = vsyncadd [#allocation6], %s36
      %s38 = sshll.u32 [#allocation5], 4
      %s39 = int_to_ptr.vmem [resolvable:$true] %s38
      %44 = dma.hbm_to_vmem [thread:$0]  %s1, 25088, %s39, [#allocation6], 256, 256, 16
    $region9: #{tpu_custom_call.1} parent=1 // pred_fallthru
      _
    // Predicated region
    $region10: #{tpu_custom_call.1} parent=1 // pred_check
      _
    $region11: #{tpu_custom_call.1} parent=1 // pred_check_branch
      %46 = sbr.rel (0) target = $region13
    $region12: #{tpu_custom_call.1} parent=1 // pred_region
      _
    $region13: #{tpu_custom_call.1} parent=1 // pred_fallthru
      _
    // Predicated region
    $region14: #{tpu_custom_call.1} parent=1 // pred_check
      _
    $region15: #{tpu_custom_call.1} parent=1 // pred_check_branch
      %48 = sbr.rel (0) target = $region17
    $region16: #{tpu_custom_call.1} parent=1 // pred_region
      %s50 = ssub.s32 8192, 8192
      %51 = vsyncadd [#allocation6], %s50
      %s52 = sshll.u32 [#allocation7], 4
      %s53 = int_to_ptr.vmem [resolvable:$true] %s52
      %58 = dma.hbm_to_vmem [thread:$0]  %s3, 8192, %s53, [#allocation6], 128, 128, 8
    $region17: #{tpu_custom_call.1} parent=1 // pred_fallthru
      _
    // Predicated region
    $region18: #{tpu_custom_call.1} parent=1 // pred_check
      _
    $region19: #{tpu_custom_call.1} parent=1 // pred_check_branch
      %60 = sbr.rel (0) target = $region21
    $region20: #{tpu_custom_call.1} parent=1 // pred_region
      _
    $region21: #{tpu_custom_call.1} parent=1 // pred_fallthru
      _
    // Predicated region
    $region22: #{tpu_custom_call.1} parent=1 // pred_check
      _
    $region23: #{tpu_custom_call.1} parent=1 // pred_check_branch
      %62 = sbr.rel (0) target = $region25
    $region24: #{tpu_custom_call.1} parent=1 // pred_region
      %s64 = ssub.s32 2048, 2048
      %65 = vsyncadd [#allocation9], %s64
      %s66 = sshll.u32 [#allocation8], 4
      %s67 = int_to_ptr.vmem [resolvable:$true] %s66
      %72 = dma.hbm_to_vmem [thread:$0]  %s5, 2048, %s67, [#allocation9], 64, 64, 4
    $region25: #{tpu_custom_call.1} parent=1 // pred_fallthru
      _
    // Predicated region
    $region26: #{tpu_custom_call.1} parent=1 // pred_check
      _
    $region27: #{tpu_custom_call.1} parent=1 // pred_check_branch
      %74 = sbr.rel (0) target = $region29
    $region28: #{tpu_custom_call.1} parent=1 // pred_region
      _
    $region29: #{tpu_custom_call.1} parent=1 // pred_fallthru
      _
    // Predicated region
    $region30: #{tpu_custom_call.1} parent=1 // pred_check
      _
    $region31: #{tpu_custom_call.1} parent=1 // pred_check_branch
      %76 = sbr.rel (0) target = $region33
    $region32: #{tpu_custom_call.1} parent=1 // pred_region
      %s78 = ssub.s32 1024, 1024
      %79 = vsyncadd [#allocation9], %s78
      %s80 = sshll.u32 [#allocation10], 4
      %s81 = int_to_ptr.vmem [resolvable:$true] %s80
      %86 = dma.hbm_to_vmem [thread:$0]  %s7, 1024, %s81, [#allocation9], 64, 64, 4
    $region33: #{tpu_custom_call.1} parent=1 // pred_fallthru
      _
    // Predicated region
    $region34: #{tpu_custom_call.1} parent=1 // pred_check
      _
    $region35: #{tpu_custom_call.1} parent=1 // pred_check_branch
      %88 = sbr.rel (0) target = $region37
    $region36: #{tpu_custom_call.1} parent=1 // pred_region
      _
    $region37: #{tpu_custom_call.1} parent=1 // pred_fallthru
      _
    // Predicated region
    $region38: #{tpu_custom_call.1} parent=1 // pred_check
      _
    $region39: #{tpu_custom_call.1} parent=1 // pred_check_branch
      %90 = sbr.rel (0) target = $region41
    $region40: #{tpu_custom_call.1} parent=1 // pred_region
      %s92 = ssub.s32 1024, 1024
      %93 = vsyncadd [#allocation12], %s92
      %s94 = sshll.u32 [#allocation11], 4
      %s95 = int_to_ptr.vmem [resolvable:$true] %s94
      %100 = dma.hbm_to_vmem [thread:$0]  %s9, 1024, %s95, [#allocation12], 64, 64, 4
    $region41: #{tpu_custom_call.1} parent=1 // pred_fallthru
      _
    // Predicated region
    $region42: #{tpu_custom_call.1} parent=1 // pred_check
      _
    $region43: #{tpu_custom_call.1} parent=1 // pred_check_branch
      %102 = sbr.rel (0) target = $region45
    $region44: #{tpu_custom_call.1} parent=1 // pred_region
      _
    $region45: #{tpu_custom_call.1} parent=1 // pred_fallthru
      _
    // Predicated region
    $region46: #{tpu_custom_call.1} parent=1 // pred_check
      _
    $region47: #{tpu_custom_call.1} parent=1 // pred_check_branch
      %104 = sbr.rel (0) target = $region49
    $region48: #{tpu_custom_call.1} parent=1 // pred_region
      %105 = dma.done [#allocation3], 896
    $region49: #{tpu_custom_call.1} parent=1 // pred_fallthru
      _
    // Predicated region
    $region50: #{tpu_custom_call.1} parent=1 // pred_check
      _
    $region51: #{tpu_custom_call.1} parent=1 // pred_check_branch
      %107 = sbr.rel (0) target = $region53
    $region52: #{tpu_custom_call.1} parent=1 // pred_region
      %108 = dma.done [#allocation6], 25088
    $region53: #{tpu_custom_call.1} parent=1 // pred_fallthru
      _
    // Predicated region
    $region54: #{tpu_custom_call.1} parent=1 // pred_check
      _
    $region55: #{tpu_custom_call.1} parent=1 // pred_check_branch
      %110 = sbr.rel (0) target = $region57
    $region56: #{tpu_custom_call.1} parent=1 // pred_region
      %111 = dma.done [#allocation6], 8192
    $region57: #{tpu_custom_call.1} parent=1 // pred_fallthru
      _
    // Predicated region
    $region58: #{tpu_custom_call.1} parent=1 // pred_check
      _
    $region59: #{tpu_custom_call.1} parent=1 // pred_check_branch
      %113 = sbr.rel (0) target = $region61
    $region60: #{tpu_custom_call.1} parent=1 // pred_region
      %114 = dma.done [#allocation9], 2048
    $region61: #{tpu_custom_call.1} parent=1 // pred_fallthru
      _
    // Predicated region
    $region62: #{tpu_custom_call.1} parent=1 // pred_check
      _
    $region63: #{tpu_custom_call.1} parent=1 // pred_check_branch
      %116 = sbr.rel (0) target = $region65
    $region64: #{tpu_custom_call.1} parent=1 // pred_region
      %117 = dma.done [#allocation9], 1024
    $region65: #{tpu_custom_call.1} parent=1 // pred_fallthru
      _
    // Predicated region
    $region66: #{tpu_custom_call.1} parent=1 // pred_check
      _
    $region67: #{tpu_custom_call.1} parent=1 // pred_check_branch
      %119 = sbr.rel (0) target = $region69
    $region68: #{tpu_custom_call.1} parent=1 // pred_region
      %120 = dma.done [#allocation12], 1024
    $region69: #{tpu_custom_call.1} parent=1 // pred_fallthru
      _
    %v122 = vld [vmem:[#allocation2] sm:$0xff]
    %v123 = vld [vmem:[#allocation2 + $0x8] sm:$0xff]
    %v124 = vld [vmem:[#allocation2 + $0x10] sm:$0xff]
    %v125 = vld [vmem:[#allocation2 + $0x18] sm:$0xf]
    %v126 = vld [vmem:[#allocation2 + $0x1c] sm:$0xff]
    %v127 = vld [vmem:[#allocation2 + $0x24] sm:$0xff]
    %v128 = vld [vmem:[#allocation2 + $0x2c] sm:$0xff]
    %v129 = vld [vmem:[#allocation2 + $0x34] sm:$0xf]
    %v130 = vld [vmem:[#allocation5] sm:$0xff]
    %v131 = vld [vmem:[#allocation5 + $0x8] sm:$0xff]
    %v132 = vld [vmem:[#allocation5 + $0x10] sm:$0xff]
    %v133 = vld [vmem:[#allocation5 + $0x18] sm:$0xff]
    %v134 = vld [vmem:[#allocation5 + $0x20] sm:$0xff]
    %v135 = vld [vmem:[#allocation5 + $0x28] sm:$0xff]
    %v136 = vld [vmem:[#allocation5 + $0x30] sm:$0xff]
    %v137 = vld [vmem:[#allocation5 + $0x38] sm:$0xff]
    %v138 = vld [vmem:[#allocation5 + $0x40] sm:$0xff]
    %v139 = vld [vmem:[#allocation5 + $0x48] sm:$0xff]
    %v140 = vld [vmem:[#allocation5 + $0x50] sm:$0xff]
    %v141 = vld [vmem:[#allocation5 + $0x58] sm:$0xff]
    %v142 = vld [vmem:[#allocation5 + $0x60] sm:$0xff]
    %v143 = vld [vmem:[#allocation5 + $0x68] sm:$0xff]
    %v144 = vld [vmem:[#allocation5 + $0x70] sm:$0xff]
    %v145 = vld [vmem:[#allocation5 + $0x78] sm:$0xff]
    %v146 = vld [vmem:[#allocation5 + $0x80] sm:$0xff]
    %v147 = vld [vmem:[#allocation5 + $0x88] sm:$0xff]
    %v148 = vld [vmem:[#allocation5 + $0x90] sm:$0xff]
    %v149 = vld [vmem:[#allocation5 + $0x98] sm:$0xff]
    %v150 = vld [vmem:[#allocation5 + $0xa0] sm:$0xff]
    %v151 = vld [vmem:[#allocation5 + $0xa8] sm:$0xff]
    %v152 = vld [vmem:[#allocation5 + $0xb0] sm:$0xff]
    %v153 = vld [vmem:[#allocation5 + $0xb8] sm:$0xff]
    %v154 = vld [vmem:[#allocation5 + $0xc0] sm:$0xff]
    %v155 = vld [vmem:[#allocation5 + $0xc8] sm:$0xff]
    %v156 = vld [vmem:[#allocation5 + $0xd0] sm:$0xff]
    %v157 = vld [vmem:[#allocation5 + $0xd8] sm:$0xff]
    %v158 = vld [vmem:[#allocation5 + $0xe0] sm:$0xff]
    %v159 = vld [vmem:[#allocation5 + $0xe8] sm:$0xff]
    %v160 = vld [vmem:[#allocation5 + $0xf0] sm:$0xff]
    %v161 = vld [vmem:[#allocation5 + $0xf8] sm:$0xff]
    %v162 = vld [vmem:[#allocation5 + $0x100] sm:$0xff]
    %v163 = vld [vmem:[#allocation5 + $0x108] sm:$0xff]
    %v164 = vld [vmem:[#allocation5 + $0x110] sm:$0xff]
    %v165 = vld [vmem:[#allocation5 + $0x118] sm:$0xff]
    %v166 = vld [vmem:[#allocation5 + $0x120] sm:$0xff]
    %v167 = vld [vmem:[#allocation5 + $0x128] sm:$0xff]
    %v168 = vld [vmem:[#allocation5 + $0x130] sm:$0xff]
    %v169 = vld [vmem:[#allocation5 + $0x138] sm:$0xff]
    %v170 = vld [vmem:[#allocation5 + $0x140] sm:$0xff]
    %v171 = vld [vmem:[#allocation5 + $0x148] sm:$0xff]
    %v172 = vld [vmem:[#allocation5 + $0x150] sm:$0xff]
    %v173 = vld [vmem:[#allocation5 + $0x158] sm:$0xff]
    %v174 = vld [vmem:[#allocation5 + $0x160] sm:$0xff]
    %v175 = vld [vmem:[#allocation5 + $0x168] sm:$0xff]
    %v176 = vld [vmem:[#allocation5 + $0x170] sm:$0xff]
    %v177 = vld [vmem:[#allocation5 + $0x178] sm:$0xff]
    %v178 = vld [vmem:[#allocation5 + $0x180] sm:$0xff]
    %v179 = vld [vmem:[#allocation5 + $0x188] sm:$0xff]
    %v180 = vld [vmem:[#allocation5 + $0x190] sm:$0xff]
    %v181 = vld [vmem:[#allocation5 + $0x198] sm:$0xff]
    %v182 = vld [vmem:[#allocation5 + $0x1a0] sm:$0xff]
    %v183 = vld [vmem:[#allocation5 + $0x1a8] sm:$0xff]
    %v184 = vld [vmem:[#allocation5 + $0x1b0] sm:$0xff]
    %v185 = vld [vmem:[#allocation5 + $0x1b8] sm:$0xff]
    %v186 = vld [vmem:[#allocation5 + $0x1c0] sm:$0xff]
    %v187 = vld [vmem:[#allocation5 + $0x1c8] sm:$0xff]
    %v188 = vld [vmem:[#allocation5 + $0x1d0] sm:$0xff]
    %v189 = vld [vmem:[#allocation5 + $0x1d8] sm:$0xff]
    %v190 = vld [vmem:[#allocation5 + $0x1e0] sm:$0xff]
    %v191 = vld [vmem:[#allocation5 + $0x1e8] sm:$0xff]
    %v192 = vld [vmem:[#allocation5 + $0x1f0] sm:$0xff]
    %v193 = vld [vmem:[#allocation5 + $0x1f8] sm:$0xff]
    %v194 = vld [vmem:[#allocation5 + $0x200] sm:$0xff]
    %v195 = vld [vmem:[#allocation5 + $0x208] sm:$0xff]
    %v196 = vld [vmem:[#allocation5 + $0x210] sm:$0xff]
    %v197 = vld [vmem:[#allocation5 + $0x218] sm:$0xff]
    %v198 = vld [vmem:[#allocation5 + $0x220] sm:$0xff]
    %v199 = vld [vmem:[#allocation5 + $0x228] sm:$0xff]
    %v200 = vld [vmem:[#allocation5 + $0x230] sm:$0xff]
    %v201 = vld [vmem:[#allocation5 + $0x238] sm:$0xff]
    %v202 = vld [vmem:[#allocation5 + $0x240] sm:$0xff]
    %v203 = vld [vmem:[#allocation5 + $0x248] sm:$0xff]
    %v204 = vld [vmem:[#allocation5 + $0x250] sm:$0xff]
    %v205 = vld [vmem:[#allocation5 + $0x258] sm:$0xff]
    %v206 = vld [vmem:[#allocation5 + $0x260] sm:$0xff]
    %v207 = vld [vmem:[#allocation5 + $0x268] sm:$0xff]
    %v208 = vld [vmem:[#allocation5 + $0x270] sm:$0xff]
    %v209 = vld [vmem:[#allocation5 + $0x278] sm:$0xff]
    %v210 = vld [vmem:[#allocation5 + $0x280] sm:$0xff]
    %v211 = vld [vmem:[#allocation5 + $0x288] sm:$0xff]
    %v212 = vld [vmem:[#allocation5 + $0x290] sm:$0xff]
    %v213 = vld [vmem:[#allocation5 + $0x298] sm:$0xff]
    %v214 = vld [vmem:[#allocation5 + $0x2a0] sm:$0xff]
    %v215 = vld [vmem:[#allocation5 + $0x2a8] sm:$0xff]
    %v216 = vld [vmem:[#allocation5 + $0x2b0] sm:$0xff]
    %v217 = vld [vmem:[#allocation5 + $0x2b8] sm:$0xff]
    %v218 = vld [vmem:[#allocation5 + $0x2c0] sm:$0xff]
    %v219 = vld [vmem:[#allocation5 + $0x2c8] sm:$0xff]
    %v220 = vld [vmem:[#allocation5 + $0x2d0] sm:$0xff]
    %v221 = vld [vmem:[#allocation5 + $0x2d8] sm:$0xff]
    %v222 = vld [vmem:[#allocation5 + $0x2e0] sm:$0xff]
    %v223 = vld [vmem:[#allocation5 + $0x2e8] sm:$0xff]
    %v224 = vld [vmem:[#allocation5 + $0x2f0] sm:$0xff]
    %v225 = vld [vmem:[#allocation5 + $0x2f8] sm:$0xff]
    %v226 = vld [vmem:[#allocation5 + $0x300] sm:$0xff]
    %v227 = vld [vmem:[#allocation5 + $0x308] sm:$0xff]
    %v228 = vld [vmem:[#allocation5 + $0x310] sm:$0xff]
    %v229 = vld [vmem:[#allocation5 + $0x318] sm:$0xff]
    %v230 = vld [vmem:[#allocation5 + $0x320] sm:$0xff]
    %v231 = vld [vmem:[#allocation5 + $0x328] sm:$0xff]
    %v232 = vld [vmem:[#allocation5 + $0x330] sm:$0xff]
    %v233 = vld [vmem:[#allocation5 + $0x338] sm:$0xff]
    %v234 = vld [vmem:[#allocation5 + $0x340] sm:$0xff]
    %v235 = vld [vmem:[#allocation5 + $0x348] sm:$0xff]
    %v236 = vld [vmem:[#allocation5 + $0x350] sm:$0xff]
    %v237 = vld [vmem:[#allocation5 + $0x358] sm:$0xff]
    %v238 = vld [vmem:[#allocation5 + $0x360] sm:$0xff]
    %v239 = vld [vmem:[#allocation5 + $0x368] sm:$0xff]
    %v240 = vld [vmem:[#allocation5 + $0x370] sm:$0xff]
    %v241 = vld [vmem:[#allocation5 + $0x378] sm:$0xff]
    %v242 = vld [vmem:[#allocation5 + $0x380] sm:$0xff]
    %v243 = vld [vmem:[#allocation5 + $0x388] sm:$0xff]
    %v244 = vld [vmem:[#allocation5 + $0x390] sm:$0xff]
    %v245 = vld [vmem:[#allocation5 + $0x398] sm:$0xff]
    %v246 = vld [vmem:[#allocation5 + $0x3a0] sm:$0xff]
    %v247 = vld [vmem:[#allocation5 + $0x3a8] sm:$0xff]
    %v248 = vld [vmem:[#allocation5 + $0x3b0] sm:$0xff]
    %v249 = vld [vmem:[#allocation5 + $0x3b8] sm:$0xff]
    %v250 = vld [vmem:[#allocation5 + $0x3c0] sm:$0xff]
    %v251 = vld [vmem:[#allocation5 + $0x3c8] sm:$0xff]
    %v252 = vld [vmem:[#allocation5 + $0x3d0] sm:$0xff]
    %v253 = vld [vmem:[#allocation5 + $0x3d8] sm:$0xff]
    %v254 = vld [vmem:[#allocation5 + $0x3e0] sm:$0xff]
    %v255 = vld [vmem:[#allocation5 + $0x3e8] sm:$0xff]
    %v256 = vld [vmem:[#allocation5 + $0x3f0] sm:$0xff]
    %v257 = vld [vmem:[#allocation5 + $0x3f8] sm:$0xff]
    %v258 = vld [vmem:[#allocation5 + $0x400] sm:$0xff]
    %v259 = vld [vmem:[#allocation5 + $0x408] sm:$0xff]
    %v260 = vld [vmem:[#allocation5 + $0x410] sm:$0xff]
    %v261 = vld [vmem:[#allocation5 + $0x418] sm:$0xff]
    %v262 = vld [vmem:[#allocation5 + $0x420] sm:$0xff]
    %v263 = vld [vmem:[#allocation5 + $0x428] sm:$0xff]
    %v264 = vld [vmem:[#allocation5 + $0x430] sm:$0xff]
    %v265 = vld [vmem:[#allocation5 + $0x438] sm:$0xff]
    %v266 = vld [vmem:[#allocation5 + $0x440] sm:$0xff]
    %v267 = vld [vmem:[#allocation5 + $0x448] sm:$0xff]
    %v268 = vld [vmem:[#allocation5 + $0x450] sm:$0xff]
    %v269 = vld [vmem:[#allocation5 + $0x458] sm:$0xff]
    %v270 = vld [vmem:[#allocation5 + $0x460] sm:$0xff]
    %v271 = vld [vmem:[#allocation5 + $0x468] sm:$0xff]
    %v272 = vld [vmem:[#allocation5 + $0x470] sm:$0xff]
    %v273 = vld [vmem:[#allocation5 + $0x478] sm:$0xff]
    %v274 = vld [vmem:[#allocation5 + $0x480] sm:$0xff]
    %v275 = vld [vmem:[#allocation5 + $0x488] sm:$0xff]
    %v276 = vld [vmem:[#allocation5 + $0x490] sm:$0xff]
    %v277 = vld [vmem:[#allocation5 + $0x498] sm:$0xff]
    %v278 = vld [vmem:[#allocation5 + $0x4a0] sm:$0xff]
    %v279 = vld [vmem:[#allocation5 + $0x4a8] sm:$0xff]
    %v280 = vld [vmem:[#allocation5 + $0x4b0] sm:$0xff]
    %v281 = vld [vmem:[#allocation5 + $0x4b8] sm:$0xff]
    %v282 = vld [vmem:[#allocation5 + $0x4c0] sm:$0xff]
    %v283 = vld [vmem:[#allocation5 + $0x4c8] sm:$0xff]
    %v284 = vld [vmem:[#allocation5 + $0x4d0] sm:$0xff]
    %v285 = vld [vmem:[#allocation5 + $0x4d8] sm:$0xff]
    %v286 = vld [vmem:[#allocation5 + $0x4e0] sm:$0xff]
    %v287 = vld [vmem:[#allocation5 + $0x4e8] sm:$0xff]
    %v288 = vld [vmem:[#allocation5 + $0x4f0] sm:$0xff]
    %v289 = vld [vmem:[#allocation5 + $0x4f8] sm:$0xff]
    %v290 = vld [vmem:[#allocation5 + $0x500] sm:$0xff]
    %v291 = vld [vmem:[#allocation5 + $0x508] sm:$0xff]
    %v292 = vld [vmem:[#allocation5 + $0x510] sm:$0xff]
    %v293 = vld [vmem:[#allocation5 + $0x518] sm:$0xff]
    %v294 = vld [vmem:[#allocation5 + $0x520] sm:$0xff]
    %v295 = vld [vmem:[#allocation5 + $0x528] sm:$0xff]
    %v296 = vld [vmem:[#allocation5 + $0x530] sm:$0xff]
    %v297 = vld [vmem:[#allocation5 + $0x538] sm:$0xff]
    %v298 = vld [vmem:[#allocation5 + $0x540] sm:$0xff]
    %v299 = vld [vmem:[#allocation5 + $0x548] sm:$0xff]
    %v300 = vld [vmem:[#allocation5 + $0x550] sm:$0xff]
    %v301 = vld [vmem:[#allocation5 + $0x558] sm:$0xff]
    %v302 = vld [vmem:[#allocation5 + $0x560] sm:$0xff]
    %v303 = vld [vmem:[#allocation5 + $0x568] sm:$0xff]
    %v304 = vld [vmem:[#allocation5 + $0x570] sm:$0xff]
    %v305 = vld [vmem:[#allocation5 + $0x578] sm:$0xff]
    %v306 = vld [vmem:[#allocation5 + $0x580] sm:$0xff]
    %v307 = vld [vmem:[#allocation5 + $0x588] sm:$0xff]
    %v308 = vld [vmem:[#allocation5 + $0x590] sm:$0xff]
    %v309 = vld [vmem:[#allocation5 + $0x598] sm:$0xff]
    %v310 = vld [vmem:[#allocation5 + $0x5a0] sm:$0xff]
    %v311 = vld [vmem:[#allocation5 + $0x5a8] sm:$0xff]
    %v312 = vld [vmem:[#allocation5 + $0x5b0] sm:$0xff]
    %v313 = vld [vmem:[#allocation5 + $0x5b8] sm:$0xff]
    %v314 = vld [vmem:[#allocation5 + $0x5c0] sm:$0xff]
    %v315 = vld [vmem:[#allocation5 + $0x5c8] sm:$0xff]
    %v316 = vld [vmem:[#allocation5 + $0x5d0] sm:$0xff]
    %v317 = vld [vmem:[#allocation5 + $0x5d8] sm:$0xff]
    %v318 = vld [vmem:[#allocation5 + $0x5e0] sm:$0xff]
    %v319 = vld [vmem:[#allocation5 + $0x5e8] sm:$0xff]
    %v320 = vld [vmem:[#allocation5 + $0x5f0] sm:$0xff]
    %v321 = vld [vmem:[#allocation5 + $0x5f8] sm:$0xff]
    %v322 = vld [vmem:[#allocation5 + $0x600] sm:$0xff]
    %v323 = vld [vmem:[#allocation5 + $0x608] sm:$0xff]
    %v324 = vld [vmem:[#allocation5 + $0x610] sm:$0xff]
    %v325 = vld [vmem:[#allocation5 + $0x618] sm:$0xff]
    %v326 = vld [vmem:[%s2] sm:$0xf]
    %v328 = vlaneseq
    %v329 = vshrl.u32 %v328, 7
    %v330 = vsub.s32 0, %v329
    %v331 = vrot.slane %v326, %v330
    %v332 = vlaneseq
    %v333 = vshrl.u32 %v332, 7
    %v334 = vsub.s32 1, %v333
    %v335 = vrot.slane %v326, %v334
    %v336 = vlaneseq
    %v337 = vshrl.u32 %v336, 7
    %v338 = vsub.s32 2, %v337
    %v339 = vrot.slane %v326, %v338
    %v340 = vlaneseq
    %v341 = vshrl.u32 %v340, 7
    %v342 = vsub.s32 3, %v341
    %v343 = vrot.slane %v326, %v342
    %v356 = vunpack.c.l.b16 %v122
    %v357 = vunpack.c.h.b16 %v122
    %v358 = vunpack.c.l.b16 %v123
    %v359 = vunpack.c.h.b16 %v123
    %v360 = vunpack.c.l.b16 %v124
    %v361 = vunpack.c.h.b16 %v124
    %v362 = vunpack.c.l.b16 %v125
    %v363 = vunpack.c.l.b16 %v126
    %v364 = vunpack.c.h.b16 %v126
    %v365 = vunpack.c.l.b16 %v127
    %v366 = vunpack.c.h.b16 %v127
    %v367 = vunpack.c.l.b16 %v128
    %v368 = vunpack.c.h.b16 %v128
    %v369 = vunpack.c.l.b16 %v129
    %v370 = vpack.c.b16 %v363, %v356
    %v371 = vpack.c.b16 %v364, %v357
    %v372 = vpack.c.b16 %v365, %v358
    %v373 = vpack.c.b16 %v366, %v359
    %v374 = vpack.c.b16 %v367, %v360
    %v375 = vpack.c.b16 %v368, %v361
    %v376 = vpack.c.b16 %v369, %v362
    %v579 = vunpack.c.l.b16 %v130
    %v580 = vunpack.c.h.b16 %v130
    %v581 = vunpack.c.l.b16 %v131
    %v582 = vunpack.c.h.b16 %v131
    %v583 = vunpack.c.l.b16 %v132
    %v584 = vunpack.c.h.b16 %v132
    %v585 = vunpack.c.l.b16 %v133
    %v586 = vunpack.c.h.b16 %v133
    %v587 = vunpack.c.l.b16 %v134
    %v588 = vunpack.c.h.b16 %v134
    %v589 = vunpack.c.l.b16 %v135
    %v590 = vunpack.c.h.b16 %v135
    %v591 = vunpack.c.l.b16 %v136
    %v592 = vunpack.c.h.b16 %v136
    %v593 = vunpack.c.l.b16 %v137
    %v594 = vunpack.c.h.b16 %v137
    %v595 = vunpack.c.l.b16 %v138
    %v596 = vunpack.c.h.b16 %v138
    %v597 = vunpack.c.l.b16 %v139
    %v598 = vunpack.c.h.b16 %v139
    %v599 = vunpack.c.l.b16 %v140
    %v600 = vunpack.c.h.b16 %v140
    %v601 = vunpack.c.l.b16 %v141
    %v602 = vunpack.c.h.b16 %v141
    %v603 = vunpack.c.l.b16 %v142
    %v604 = vunpack.c.h.b16 %v142
    %v605 = vunpack.c.l.b16 %v143
    %v606 = vunpack.c.h.b16 %v143
    %v607 = vunpack.c.l.b16 %v144
    %v608 = vunpack.c.h.b16 %v144
    %v609 = vunpack.c.l.b16 %v145
    %v610 = vunpack.c.h.b16 %v145
    %v611 = vunpack.c.l.b16 %v146
    %v612 = vunpack.c.h.b16 %v146
    %v613 = vunpack.c.l.b16 %v147
    %v614 = vunpack.c.h.b16 %v147
    %v615 = vunpack.c.l.b16 %v148
    %v616 = vunpack.c.h.b16 %v148
    %v617 = vunpack.c.l.b16 %v149
    %v618 = vunpack.c.h.b16 %v149
    %v619 = vunpack.c.l.b16 %v150
    %v620 = vunpack.c.h.b16 %v150
    %v621 = vunpack.c.l.b16 %v151
    %v622 = vunpack.c.h.b16 %v151
    %v623 = vunpack.c.l.b16 %v152
    %v624 = vunpack.c.h.b16 %v152
    %v625 = vunpack.c.l.b16 %v153
    %v626 = vunpack.c.h.b16 %v153
    %v627 = vunpack.c.l.b16 %v154
    %v628 = vunpack.c.h.b16 %v154
    %v629 = vunpack.c.l.b16 %v155
    %v630 = vunpack.c.h.b16 %v155
    %v631 = vunpack.c.l.b16 %v156
    %v632 = vunpack.c.h.b16 %v156
    %v633 = vunpack.c.l.b16 %v157
    %v634 = vunpack.c.h.b16 %v157
    %v635 = vunpack.c.l.b16 %v158
    %v636 = vunpack.c.h.b16 %v158
    %v637 = vunpack.c.l.b16 %v159
    %v638 = vunpack.c.h.b16 %v159
    %v639 = vunpack.c.l.b16 %v160
    %v640 = vunpack.c.h.b16 %v160
    %v641 = vunpack.c.l.b16 %v161
    %v642 = vunpack.c.h.b16 %v161
    %v643 = vunpack.c.l.b16 %v162
    %v644 = vunpack.c.h.b16 %v162
    %v645 = vunpack.c.l.b16 %v163
    %v646 = vunpack.c.h.b16 %v163
    %v647 = vunpack.c.l.b16 %v164
    %v648 = vunpack.c.h.b16 %v164
    %v649 = vunpack.c.l.b16 %v165
    %v650 = vunpack.c.h.b16 %v165
    %v651 = vunpack.c.l.b16 %v166
    %v652 = vunpack.c.h.b16 %v166
    %v653 = vunpack.c.l.b16 %v167
    %v654 = vunpack.c.h.b16 %v167
    %v655 = vunpack.c.l.b16 %v168
    %v656 = vunpack.c.h.b16 %v168
    %v657 = vunpack.c.l.b16 %v169
    %v658 = vunpack.c.h.b16 %v169
    %v659 = vunpack.c.l.b16 %v170
    %v660 = vunpack.c.h.b16 %v170
    %v661 = vunpack.c.l.b16 %v171
    %v662 = vunpack.c.h.b16 %v171
    %v663 = vunpack.c.l.b16 %v172
    %v664 = vunpack.c.h.b16 %v172
    %v665 = vunpack.c.l.b16 %v173
    %v666 = vunpack.c.h.b16 %v173
    %v667 = vunpack.c.l.b16 %v174
    %v668 = vunpack.c.h.b16 %v174
    %v669 = vunpack.c.l.b16 %v175
    %v670 = vunpack.c.h.b16 %v175
    %v671 = vunpack.c.l.b16 %v176
    %v672 = vunpack.c.h.b16 %v176
    %v673 = vunpack.c.l.b16 %v177
    %v674 = vunpack.c.h.b16 %v177
    %v675 = vunpack.c.l.b16 %v178
    %v676 = vunpack.c.h.b16 %v178
    %v677 = vunpack.c.l.b16 %v179
    %v678 = vunpack.c.h.b16 %v179
    %v679 = vunpack.c.l.b16 %v180
    %v680 = vunpack.c.h.b16 %v180
    %v681 = vunpack.c.l.b16 %v181
    %v682 = vunpack.c.h.b16 %v181
    %v683 = vunpack.c.l.b16 %v182
    %v684 = vunpack.c.h.b16 %v182
    %v685 = vunpack.c.l.b16 %v183
    %v686 = vunpack.c.h.b16 %v183
    %v687 = vunpack.c.l.b16 %v184
    %v688 = vunpack.c.h.b16 %v184
    %v689 = vunpack.c.l.b16 %v185
    %v690 = vunpack.c.h.b16 %v185
    %v691 = vunpack.c.l.b16 %v186
    %v692 = vunpack.c.h.b16 %v186
    %v693 = vunpack.c.l.b16 %v187
    %v694 = vunpack.c.h.b16 %v187
    %v695 = vunpack.c.l.b16 %v188
    %v696 = vunpack.c.h.b16 %v188
    %v697 = vunpack.c.l.b16 %v189
    %v698 = vunpack.c.h.b16 %v189
    %v699 = vunpack.c.l.b16 %v190
    %v700 = vunpack.c.h.b16 %v190
    %v701 = vunpack.c.l.b16 %v191
    %v702 = vunpack.c.h.b16 %v191
    %v703 = vunpack.c.l.b16 %v192
    %v704 = vunpack.c.h.b16 %v192
    %v705 = vunpack.c.l.b16 %v193
    %v706 = vunpack.c.h.b16 %v193
    %v707 = vunpack.c.l.b16 %v194
    %v708 = vunpack.c.h.b16 %v194
    %v709 = vunpack.c.l.b16 %v195
    %v710 = vunpack.c.h.b16 %v195
    %v711 = vunpack.c.l.b16 %v196
    %v712 = vunpack.c.h.b16 %v196
    %v713 = vunpack.c.l.b16 %v197
    %v714 = vunpack.c.h.b16 %v197
    %v715 = vunpack.c.l.b16 %v198
    %v716 = vunpack.c.h.b16 %v198
    %v717 = vunpack.c.l.b16 %v199
    %v718 = vunpack.c.h.b16 %v199
    %v719 = vunpack.c.l.b16 %v200
    %v720 = vunpack.c.h.b16 %v200
    %v721 = vunpack.c.l.b16 %v201
    %v722 = vunpack.c.h.b16 %v201
    %v723 = vunpack.c.l.b16 %v202
    %v724 = vunpack.c.h.b16 %v202
    %v725 = vunpack.c.l.b16 %v203
    %v726 = vunpack.c.h.b16 %v203
    %v727 = vunpack.c.l.b16 %v204
    %v728 = vunpack.c.h.b16 %v204
    %v729 = vunpack.c.l.b16 %v205
    %v730 = vunpack.c.h.b16 %v205
    %v731 = vunpack.c.l.b16 %v206
    %v732 = vunpack.c.h.b16 %v206
    %v733 = vunpack.c.l.b16 %v207
    %v734 = vunpack.c.h.b16 %v207
    %v735 = vunpack.c.l.b16 %v208
    %v736 = vunpack.c.h.b16 %v208
    %v737 = vunpack.c.l.b16 %v209
    %v738 = vunpack.c.h.b16 %v209
    %v739 = vunpack.c.l.b16 %v210
    %v740 = vunpack.c.h.b16 %v210
    %v741 = vunpack.c.l.b16 %v211
    %v742 = vunpack.c.h.b16 %v211
    %v743 = vunpack.c.l.b16 %v212
    %v744 = vunpack.c.h.b16 %v212
    %v745 = vunpack.c.l.b16 %v213
    %v746 = vunpack.c.h.b16 %v213
    %v747 = vunpack.c.l.b16 %v214
    %v748 = vunpack.c.h.b16 %v214
    %v749 = vunpack.c.l.b16 %v215
    %v750 = vunpack.c.h.b16 %v215
    %v751 = vunpack.c.l.b16 %v216
    %v752 = vunpack.c.h.b16 %v216
    %v753 = vunpack.c.l.b16 %v217
    %v754 = vunpack.c.h.b16 %v217
    %v755 = vunpack.c.l.b16 %v218
    %v756 = vunpack.c.h.b16 %v218
    %v757 = vunpack.c.l.b16 %v219
    %v758 = vunpack.c.h.b16 %v219
    %v759 = vunpack.c.l.b16 %v220
    %v760 = vunpack.c.h.b16 %v220
    %v761 = vunpack.c.l.b16 %v221
    %v762 = vunpack.c.h.b16 %v221
    %v763 = vunpack.c.l.b16 %v222
    %v764 = vunpack.c.h.b16 %v222
    %v765 = vunpack.c.l.b16 %v223
    %v766 = vunpack.c.h.b16 %v223
    %v767 = vunpack.c.l.b16 %v224
    %v768 = vunpack.c.h.b16 %v224
    %v769 = vunpack.c.l.b16 %v225
    %v770 = vunpack.c.h.b16 %v225
    %v771 = vunpack.c.l.b16 %v226
    %v772 = vunpack.c.h.b16 %v226
    %v773 = vunpack.c.l.b16 %v227
    %v774 = vunpack.c.h.b16 %v227
    %v775 = vunpack.c.l.b16 %v228
    %v776 = vunpack.c.h.b16 %v228
    %v777 = vunpack.c.l.b16 %v229
    %v778 = vunpack.c.h.b16 %v229
    %v779 = vunpack.c.l.b16 %v230
    %v780 = vunpack.c.h.b16 %v230
    %v781 = vunpack.c.l.b16 %v231
    %v782 = vunpack.c.h.b16 %v231
    %v783 = vunpack.c.l.b16 %v232
    %v784 = vunpack.c.h.b16 %v232
    %v785 = vunpack.c.l.b16 %v233
    %v786 = vunpack.c.h.b16 %v233
    %v787 = vunpack.c.l.b16 %v234
    %v788 = vunpack.c.h.b16 %v234
    %v789 = vunpack.c.l.b16 %v235
    %v790 = vunpack.c.h.b16 %v235
    %v791 = vunpack.c.l.b16 %v236
    %v792 = vunpack.c.h.b16 %v236
    %v793 = vunpack.c.l.b16 %v237
    %v794 = vunpack.c.h.b16 %v237
    %v795 = vunpack.c.l.b16 %v238
    %v796 = vunpack.c.h.b16 %v238
    %v797 = vunpack.c.l.b16 %v239
    %v798 = vunpack.c.h.b16 %v239
    %v799 = vunpack.c.l.b16 %v240
    %v800 = vunpack.c.h.b16 %v240
    %v801 = vunpack.c.l.b16 %v241
    %v802 = vunpack.c.h.b16 %v241
    %v803 = vunpack.c.l.b16 %v242
    %v804 = vunpack.c.h.b16 %v242
    %v805 = vunpack.c.l.b16 %v243
    %v806 = vunpack.c.h.b16 %v243
    %v807 = vunpack.c.l.b16 %v244
    %v808 = vunpack.c.h.b16 %v244
    %v809 = vunpack.c.l.b16 %v245
    %v810 = vunpack.c.h.b16 %v245
    %v811 = vunpack.c.l.b16 %v246
    %v812 = vunpack.c.h.b16 %v246
    %v813 = vunpack.c.l.b16 %v247
    %v814 = vunpack.c.h.b16 %v247
    %v815 = vunpack.c.l.b16 %v248
    %v816 = vunpack.c.h.b16 %v248
    %v817 = vunpack.c.l.b16 %v249
    %v818 = vunpack.c.h.b16 %v249
    %v819 = vunpack.c.l.b16 %v250
    %v820 = vunpack.c.h.b16 %v250
    %v821 = vunpack.c.l.b16 %v251
    %v822 = vunpack.c.h.b16 %v251
    %v823 = vunpack.c.l.b16 %v252
    %v824 = vunpack.c.h.b16 %v252
    %v825 = vunpack.c.l.b16 %v253
    %v826 = vunpack.c.h.b16 %v253
    %v827 = vunpack.c.l.b16 %v254
    %v828 = vunpack.c.h.b16 %v254
    %v829 = vunpack.c.l.b16 %v255
    %v830 = vunpack.c.h.b16 %v255
    %v831 = vunpack.c.l.b16 %v256
    %v832 = vunpack.c.h.b16 %v256
    %v833 = vunpack.c.l.b16 %v257
    %v834 = vunpack.c.h.b16 %v257
    %v835 = vunpack.c.l.b16 %v258
    %v836 = vunpack.c.h.b16 %v258
    %v837 = vunpack.c.l.b16 %v259
    %v838 = vunpack.c.h.b16 %v259
    %v839 = vunpack.c.l.b16 %v260
    %v840 = vunpack.c.h.b16 %v260
    %v841 = vunpack.c.l.b16 %v261
    %v842 = vunpack.c.h.b16 %v261
    %v843 = vunpack.c.l.b16 %v262
    %v844 = vunpack.c.h.b16 %v262
    %v845 = vunpack.c.l.b16 %v263
    %v846 = vunpack.c.h.b16 %v263
    %v847 = vunpack.c.l.b16 %v264
    %v848 = vunpack.c.h.b16 %v264
    %v849 = vunpack.c.l.b16 %v265
    %v850 = vunpack.c.h.b16 %v265
    %v851 = vunpack.c.l.b16 %v266
    %v852 = vunpack.c.h.b16 %v266
    %v853 = vunpack.c.l.b16 %v267
    %v854 = vunpack.c.h.b16 %v267
    %v855 = vunpack.c.l.b16 %v268
    %v856 = vunpack.c.h.b16 %v268
    %v857 = vunpack.c.l.b16 %v269
    %v858 = vunpack.c.h.b16 %v269
    %v859 = vunpack.c.l.b16 %v270
    %v860 = vunpack.c.h.b16 %v270
    %v861 = vunpack.c.l.b16 %v271
    %v862 = vunpack.c.h.b16 %v271
    %v863 = vunpack.c.l.b16 %v272
    %v864 = vunpack.c.h.b16 %v272
    %v865 = vunpack.c.l.b16 %v273
    %v866 = vunpack.c.h.b16 %v273
    %v867 = vunpack.c.l.b16 %v274
    %v868 = vunpack.c.h.b16 %v274
    %v869 = vunpack.c.l.b16 %v275
    %v870 = vunpack.c.h.b16 %v275
    %v871 = vunpack.c.l.b16 %v276
    %v872 = vunpack.c.h.b16 %v276
    %v873 = vunpack.c.l.b16 %v277
    %v874 = vunpack.c.h.b16 %v277
    %v875 = vunpack.c.l.b16 %v278
    %v876 = vunpack.c.h.b16 %v278
    %v877 = vunpack.c.l.b16 %v279
    %v878 = vunpack.c.h.b16 %v279
    %v879 = vunpack.c.l.b16 %v280
    %v880 = vunpack.c.h.b16 %v280
    %v881 = vunpack.c.l.b16 %v281
    %v882 = vunpack.c.h.b16 %v281
    %v883 = vunpack.c.l.b16 %v282
    %v884 = vunpack.c.h.b16 %v282
    %v885 = vunpack.c.l.b16 %v283
    %v886 = vunpack.c.h.b16 %v283
    %v887 = vunpack.c.l.b16 %v284
    %v888 = vunpack.c.h.b16 %v284
    %v889 = vunpack.c.l.b16 %v285
    %v890 = vunpack.c.h.b16 %v285
    %v891 = vunpack.c.l.b16 %v286
    %v892 = vunpack.c.h.b16 %v286
    %v893 = vunpack.c.l.b16 %v287
    %v894 = vunpack.c.h.b16 %v287
    %v895 = vunpack.c.l.b16 %v288
    %v896 = vunpack.c.h.b16 %v288
    %v897 = vunpack.c.l.b16 %v289
    %v898 = vunpack.c.h.b16 %v289
    %v899 = vunpack.c.l.b16 %v290
    %v900 = vunpack.c.h.b16 %v290
    %v901 = vunpack.c.l.b16 %v291
    %v902 = vunpack.c.h.b16 %v291
    %v903 = vunpack.c.l.b16 %v292
    %v904 = vunpack.c.h.b16 %v292
    %v905 = vunpack.c.l.b16 %v293
    %v906 = vunpack.c.h.b16 %v293
    %v907 = vunpack.c.l.b16 %v294
    %v908 = vunpack.c.h.b16 %v294
    %v909 = vunpack.c.l.b16 %v295
    %v910 = vunpack.c.h.b16 %v295
    %v911 = vunpack.c.l.b16 %v296
    %v912 = vunpack.c.h.b16 %v296
    %v913 = vunpack.c.l.b16 %v297
    %v914 = vunpack.c.h.b16 %v297
    %v915 = vunpack.c.l.b16 %v298
    %v916 = vunpack.c.h.b16 %v298
    %v917 = vunpack.c.l.b16 %v299
    %v918 = vunpack.c.h.b16 %v299
    %v919 = vunpack.c.l.b16 %v300
    %v920 = vunpack.c.h.b16 %v300
    %v921 = vunpack.c.l.b16 %v301
    %v922 = vunpack.c.h.b16 %v301
    %v923 = vunpack.c.l.b16 %v302
    %v924 = vunpack.c.h.b16 %v302
    %v925 = vunpack.c.l.b16 %v303
    %v926 = vunpack.c.h.b16 %v303
    %v927 = vunpack.c.l.b16 %v304
    %v928 = vunpack.c.h.b16 %v304
    %v929 = vunpack.c.l.b16 %v305
    %v930 = vunpack.c.h.b16 %v305
    %v931 = vunpack.c.l.b16 %v306
    %v932 = vunpack.c.h.b16 %v306
    %v933 = vunpack.c.l.b16 %v307
    %v934 = vunpack.c.h.b16 %v307
    %v935 = vunpack.c.l.b16 %v308
    %v936 = vunpack.c.h.b16 %v308
    %v937 = vunpack.c.l.b16 %v309
    %v938 = vunpack.c.h.b16 %v309
    %v939 = vunpack.c.l.b16 %v310
    %v940 = vunpack.c.h.b16 %v310
    %v941 = vunpack.c.l.b16 %v311
    %v942 = vunpack.c.h.b16 %v311
    %v943 = vunpack.c.l.b16 %v312
    %v944 = vunpack.c.h.b16 %v312
    %v945 = vunpack.c.l.b16 %v313
    %v946 = vunpack.c.h.b16 %v313
    %v947 = vunpack.c.l.b16 %v314
    %v948 = vunpack.c.h.b16 %v314
    %v949 = vunpack.c.l.b16 %v315
    %v950 = vunpack.c.h.b16 %v315
    %v951 = vunpack.c.l.b16 %v316
    %v952 = vunpack.c.h.b16 %v316
    %v953 = vunpack.c.l.b16 %v317
    %v954 = vunpack.c.h.b16 %v317
    %v955 = vunpack.c.l.b16 %v318
    %v956 = vunpack.c.h.b16 %v318
    %v957 = vunpack.c.l.b16 %v319
    %v958 = vunpack.c.h.b16 %v319
    %v959 = vunpack.c.l.b16 %v320
    %v960 = vunpack.c.h.b16 %v320
    %v961 = vunpack.c.l.b16 %v321
    %v962 = vunpack.c.h.b16 %v321
    %v963 = vunpack.c.l.b16 %v322
    %v964 = vunpack.c.h.b16 %v322
    %v965 = vunpack.c.l.b16 %v323
    %v966 = vunpack.c.h.b16 %v323
    %v967 = vunpack.c.l.b16 %v324
    %v968 = vunpack.c.h.b16 %v324
    %v969 = vunpack.c.l.b16 %v325
    %v970 = vunpack.c.h.b16 %v325
    %v971 = vpack.c.b16 %v583, %v579
    %v972 = vpack.c.b16 %v584, %v580
    %v973 = vpack.c.b16 %v585, %v581
    %v974 = vpack.c.b16 %v586, %v582
    %v975 = vpack.c.b16 %v591, %v587
    %v976 = vpack.c.b16 %v592, %v588
    %v977 = vpack.c.b16 %v593, %v589
    %v978 = vpack.c.b16 %v594, %v590
    %v979 = vpack.c.b16 %v599, %v595
    %v980 = vpack.c.b16 %v600, %v596
    %v981 = vpack.c.b16 %v601, %v597
    %v982 = vpack.c.b16 %v602, %v598
    %v983 = vpack.c.b16 %v607, %v603
    %v984 = vpack.c.b16 %v608, %v604
    %v985 = vpack.c.b16 %v609, %v605
    %v986 = vpack.c.b16 %v610, %v606
    %v987 = vpack.c.b16 %v615, %v611
    %v988 = vpack.c.b16 %v616, %v612
    %v989 = vpack.c.b16 %v617, %v613
    %v990 = vpack.c.b16 %v618, %v614
    %v991 = vpack.c.b16 %v623, %v619
    %v992 = vpack.c.b16 %v624, %v620
    %v993 = vpack.c.b16 %v625, %v621
    %v994 = vpack.c.b16 %v626, %v622
    %v995 = vpack.c.b16 %v631, %v627
    %v996 = vpack.c.b16 %v632, %v628
    %v997 = vpack.c.b16 %v633, %v629
    %v998 = vpack.c.b16 %v634, %v630
    %v999 = vpack.c.b16 %v639, %v635
    %v1000 = vpack.c.b16 %v640, %v636
    %v1001 = vpack.c.b16 %v641, %v637
    %v1002 = vpack.c.b16 %v642, %v638
    %v1003 = vpack.c.b16 %v647, %v643
    %v1004 = vpack.c.b16 %v648, %v644
    %v1005 = vpack.c.b16 %v649, %v645
    %v1006 = vpack.c.b16 %v650, %v646
    %v1007 = vpack.c.b16 %v655, %v651
    %v1008 = vpack.c.b16 %v656, %v652
    %v1009 = vpack.c.b16 %v657, %v653
    %v1010 = vpack.c.b16 %v658, %v654
    %v1011 = vpack.c.b16 %v663, %v659
    %v1012 = vpack.c.b16 %v664, %v660
    %v1013 = vpack.c.b16 %v665, %v661
    %v1014 = vpack.c.b16 %v666, %v662
    %v1015 = vpack.c.b16 %v671, %v667
    %v1016 = vpack.c.b16 %v672, %v668
    %v1017 = vpack.c.b16 %v673, %v669
    %v1018 = vpack.c.b16 %v674, %v670
    %v1019 = vpack.c.b16 %v679, %v675
    %v1020 = vpack.c.b16 %v680, %v676
    %v1021 = vpack.c.b16 %v681, %v677
    %v1022 = vpack.c.b16 %v682, %v678
    %v1023 = vpack.c.b16 %v687, %v683
    %v1024 = vpack.c.b16 %v688, %v684
    %v1025 = vpack.c.b16 %v689, %v685
    %v1026 = vpack.c.b16 %v690, %v686
    %v1027 = vpack.c.b16 %v695, %v691
    %v1028 = vpack.c.b16 %v696, %v692
    %v1029 = vpack.c.b16 %v697, %v693
    %v1030 = vpack.c.b16 %v698, %v694
    %v1031 = vpack.c.b16 %v703, %v699
    %v1032 = vpack.c.b16 %v704, %v700
    %v1033 = vpack.c.b16 %v705, %v701
    %v1034 = vpack.c.b16 %v706, %v702
    %v1035 = vpack.c.b16 %v711, %v707
    %v1036 = vpack.c.b16 %v712, %v708
    %v1037 = vpack.c.b16 %v713, %v709
    %v1038 = vpack.c.b16 %v714, %v710
    %v1039 = vpack.c.b16 %v719, %v715
    %v1040 = vpack.c.b16 %v720, %v716
    %v1041 = vpack.c.b16 %v721, %v717
    %v1042 = vpack.c.b16 %v722, %v718
    %v1043 = vpack.c.b16 %v727, %v723
    %v1044 = vpack.c.b16 %v728, %v724
    %v1045 = vpack.c.b16 %v729, %v725
    %v1046 = vpack.c.b16 %v730, %v726
    %v1047 = vpack.c.b16 %v735, %v731
    %v1048 = vpack.c.b16 %v736, %v732
    %v1049 = vpack.c.b16 %v737, %v733
    %v1050 = vpack.c.b16 %v738, %v734
    %v1051 = vpack.c.b16 %v743, %v739
    %v1052 = vpack.c.b16 %v744, %v740
    %v1053 = vpack.c.b16 %v745, %v741
    %v1054 = vpack.c.b16 %v746, %v742
    %v1055 = vpack.c.b16 %v751, %v747
    %v1056 = vpack.c.b16 %v752, %v748
    %v1057 = vpack.c.b16 %v753, %v749
    %v1058 = vpack.c.b16 %v754, %v750
    %v1059 = vpack.c.b16 %v759, %v755
    %v1060 = vpack.c.b16 %v760, %v756
    %v1061 = vpack.c.b16 %v761, %v757
    %v1062 = vpack.c.b16 %v762, %v758
    %v1063 = vpack.c.b16 %v767, %v763
    %v1064 = vpack.c.b16 %v768, %v764
    %v1065 = vpack.c.b16 %v769, %v765
    %v1066 = vpack.c.b16 %v770, %v766
    %v1067 = vpack.c.b16 %v775, %v771
    %v1068 = vpack.c.b16 %v776, %v772
    %v1069 = vpack.c.b16 %v777, %v773
    %v1070 = vpack.c.b16 %v778, %v774
    %v1071 = vpack.c.b16 %v783, %v779
    %v1072 = vpack.c.b16 %v784, %v780
    %v1073 = vpack.c.b16 %v785, %v781
    %v1074 = vpack.c.b16 %v786, %v782
    %v1075 = vpack.c.b16 %v791, %v787
    %v1076 = vpack.c.b16 %v792, %v788
    %v1077 = vpack.c.b16 %v793, %v789
    %v1078 = vpack.c.b16 %v794, %v790
    %v1079 = vpack.c.b16 %v799, %v795
    %v1080 = vpack.c.b16 %v800, %v796
    %v1081 = vpack.c.b16 %v801, %v797
    %v1082 = vpack.c.b16 %v802, %v798
    %v1083 = vpack.c.b16 %v807, %v803
    %v1084 = vpack.c.b16 %v808, %v804
    %v1085 = vpack.c.b16 %v809, %v805
    %v1086 = vpack.c.b16 %v810, %v806
    %v1087 = vpack.c.b16 %v815, %v811
    %v1088 = vpack.c.b16 %v816, %v812
    %v1089 = vpack.c.b16 %v817, %v813
    %v1090 = vpack.c.b16 %v818, %v814
    %v1091 = vpack.c.b16 %v823, %v819
    %v1092 = vpack.c.b16 %v824, %v820
    %v1093 = vpack.c.b16 %v825, %v821
    %v1094 = vpack.c.b16 %v826, %v822
    %v1095 = vpack.c.b16 %v831, %v827
    %v1096 = vpack.c.b16 %v832, %v828
    %v1097 = vpack.c.b16 %v833, %v829
    %v1098 = vpack.c.b16 %v834, %v830
    %v1099 = vpack.c.b16 %v839, %v835
    %v1100 = vpack.c.b16 %v840, %v836
    %v1101 = vpack.c.b16 %v841, %v837
    %v1102 = vpack.c.b16 %v842, %v838
    %v1103 = vpack.c.b16 %v847, %v843
    %v1104 = vpack.c.b16 %v848, %v844
    %v1105 = vpack.c.b16 %v849, %v845
    %v1106 = vpack.c.b16 %v850, %v846
    %v1107 = vpack.c.b16 %v855, %v851
    %v1108 = vpack.c.b16 %v856, %v852
    %v1109 = vpack.c.b16 %v857, %v853
    %v1110 = vpack.c.b16 %v858, %v854
    %v1111 = vpack.c.b16 %v863, %v859
    %v1112 = vpack.c.b16 %v864, %v860
    %v1113 = vpack.c.b16 %v865, %v861
    %v1114 = vpack.c.b16 %v866, %v862
    %v1115 = vpack.c.b16 %v871, %v867
    %v1116 = vpack.c.b16 %v872, %v868
    %v1117 = vpack.c.b16 %v873, %v869
    %v1118 = vpack.c.b16 %v874, %v870
    %v1119 = vpack.c.b16 %v879, %v875
    %v1120 = vpack.c.b16 %v880, %v876
    %v1121 = vpack.c.b16 %v881, %v877
    %v1122 = vpack.c.b16 %v882, %v878
    %v1123 = vpack.c.b16 %v887, %v883
    %v1124 = vpack.c.b16 %v888, %v884
    %v1125 = vpack.c.b16 %v889, %v885
    %v1126 = vpack.c.b16 %v890, %v886
    %v1127 = vpack.c.b16 %v895, %v891
    %v1128 = vpack.c.b16 %v896, %v892
    %v1129 = vpack.c.b16 %v897, %v893
    %v1130 = vpack.c.b16 %v898, %v894
    %v1131 = vpack.c.b16 %v903, %v899
    %v1132 = vpack.c.b16 %v904, %v900
    %v1133 = vpack.c.b16 %v905, %v901
    %v1134 = vpack.c.b16 %v906, %v902
    %v1135 = vpack.c.b16 %v911, %v907
    %v1136 = vpack.c.b16 %v912, %v908
    %v1137 = vpack.c.b16 %v913, %v909
    %v1138 = vpack.c.b16 %v914, %v910
    %v1139 = vpack.c.b16 %v919, %v915
    %v1140 = vpack.c.b16 %v920, %v916
    %v1141 = vpack.c.b16 %v921, %v917
    %v1142 = vpack.c.b16 %v922, %v918
    %v1143 = vpack.c.b16 %v927, %v923
    %v1144 = vpack.c.b16 %v928, %v924
    %v1145 = vpack.c.b16 %v929, %v925
    %v1146 = vpack.c.b16 %v930, %v926
    %v1147 = vpack.c.b16 %v935, %v931
    %v1148 = vpack.c.b16 %v936, %v932
    %v1149 = vpack.c.b16 %v937, %v933
    %v1150 = vpack.c.b16 %v938, %v934
    %v1151 = vpack.c.b16 %v943, %v939
    %v1152 = vpack.c.b16 %v944, %v940
    %v1153 = vpack.c.b16 %v945, %v941
    %v1154 = vpack.c.b16 %v946, %v942
    %v1155 = vpack.c.b16 %v951, %v947
    %v1156 = vpack.c.b16 %v952, %v948
    %v1157 = vpack.c.b16 %v953, %v949
    %v1158 = vpack.c.b16 %v954, %v950
    %v1159 = vpack.c.b16 %v959, %v955
    %v1160 = vpack.c.b16 %v960, %v956
    %v1161 = vpack.c.b16 %v961, %v957
    %v1162 = vpack.c.b16 %v962, %v958
    %v1163 = vpack.c.b16 %v967, %v963
    %v1164 = vpack.c.b16 %v968, %v964
    %v1165 = vpack.c.b16 %v969, %v965
    %v1166 = vpack.c.b16 %v970, %v966
    %vm1363 = vcmask 130048
    %v1365 = vsel %vm1363, %v376, 0
    %1367 = vmatprep.subr.bf16.mxu0 %v972
    %1368 = vmatpush1.bf16.msra.mxu0 %v971
    %1369 = vmatprep.subr.bf16.mxu0 %v976
    %1370 = vmatpush1.bf16.msra.mxu0 %v975
    %1371 = vmatprep.subr.bf16.mxu0 %v980
    %1372 = vmatpush1.bf16.msra.mxu0 %v979
    %1373 = vmatprep.subr.bf16.mxu0 %v984
    %1374 = vmatpush1.bf16.msra.mxu0 %v983
    %1375 = vmatprep.subr.bf16.mxu0 %v988
    %1376 = vmatpush1.bf16.msra.mxu0 %v987
    %1377 = vmatprep.subr.bf16.mxu0 %v992
    %1378 = vmatpush1.bf16.msra.mxu0 %v991
    %1379 = vmatprep.subr.bf16.mxu0 %v996
    %1380 = vmatpush1.bf16.msra.mxu0 %v995
    %1381 = vmatprep.subr.bf16.mxu0 %v1000
    %1382 = vmatpush1.bf16.msra.mxu0 %v999
    %1383 = vmatprep.subr.bf16.mxu0 %v1004
    %1384 = vmatpush1.bf16.msra.mxu0 %v1003
    %1385 = vmatprep.subr.bf16.mxu0 %v1008
    %1386 = vmatpush1.bf16.msra.mxu0 %v1007
    %1387 = vmatprep.subr.bf16.mxu0 %v1012
    %1388 = vmatpush1.bf16.msra.mxu0 %v1011
    %1389 = vmatprep.subr.bf16.mxu0 %v1016
    %1390 = vmatpush1.bf16.msra.mxu0 %v1015
    %1391 = vmatprep.subr.bf16.mxu0 %v1020
    %1392 = vmatpush1.bf16.msra.mxu0 %v1019
    %1393 = vmatprep.subr.bf16.mxu0 %v1024
    %1394 = vmatpush1.bf16.msra.mxu0 %v1023
    %1395 = vmatprep.subr.bf16.mxu0 %v1028
    %1396 = vmatpush1.bf16.msra.mxu0 %v1027
    %1397 = vmatprep.subr.bf16.mxu0 %v1032
    %1398 = vmatpush1.bf16.msra.mxu0 %v1031
    %1399 = vmatprep.mubr.bf16.mxu0 %v371
    %1400 = vmatmul.mubr.bf16.gmra.mrb[0].mxu0 %v370
    %v1401 = vpop.f32.mrb[0].mxu0
    %v1402 = vadd.f32 %v331, %v1401
    %v1403 = vpop.f32.mrb[0].mxu0
    %v1404 = vadd.f32 %v335, %v1403
    %v1405 = vpop.f32.mrb[0].mxu0
    %v1406 = vadd.f32 %v331, %v1405
    %v1407 = vpop.f32.mrb[0].mxu0
    %v1408 = vadd.f32 %v335, %v1407
    %1409 = vdwg.mxu0
    %1410 = vmatprep.subr.bf16.mxu0 %v1036
    %1411 = vmatpush1.bf16.msra.mxu0 %v1035
    %1412 = vmatprep.subr.bf16.mxu0 %v1040
    %1413 = vmatpush1.bf16.msra.mxu0 %v1039
    %1414 = vmatprep.subr.bf16.mxu0 %v1044
    %1415 = vmatpush1.bf16.msra.mxu0 %v1043
    %1416 = vmatprep.subr.bf16.mxu0 %v1048
    %1417 = vmatpush1.bf16.msra.mxu0 %v1047
    %1418 = vmatprep.subr.bf16.mxu0 %v1052
    %1419 = vmatpush1.bf16.msra.mxu0 %v1051
    %1420 = vmatprep.subr.bf16.mxu0 %v1056
    %1421 = vmatpush1.bf16.msra.mxu0 %v1055
    %1422 = vmatprep.subr.bf16.mxu0 %v1060
    %1423 = vmatpush1.bf16.msra.mxu0 %v1059
    %1424 = vmatprep.subr.bf16.mxu0 %v1064
    %1425 = vmatpush1.bf16.msra.mxu0 %v1063
    %1426 = vmatprep.subr.bf16.mxu0 %v1068
    %1427 = vmatpush1.bf16.msra.mxu0 %v1067
    %1428 = vmatprep.subr.bf16.mxu0 %v1072
    %1429 = vmatpush1.bf16.msra.mxu0 %v1071
    %1430 = vmatprep.subr.bf16.mxu0 %v1076
    %1431 = vmatpush1.bf16.msra.mxu0 %v1075
    %1432 = vmatprep.subr.bf16.mxu0 %v1080
    %1433 = vmatpush1.bf16.msra.mxu0 %v1079
    %1434 = vmatprep.subr.bf16.mxu0 %v1084
    %1435 = vmatpush1.bf16.msra.mxu0 %v1083
    %1436 = vmatprep.subr.bf16.mxu0 %v1088
    %1437 = vmatpush1.bf16.msra.mxu0 %v1087
    %1438 = vmatprep.subr.bf16.mxu0 %v1092
    %1439 = vmatpush1.bf16.msra.mxu0 %v1091
    %1440 = vmatprep.subr.bf16.mxu0 %v1096
    %1441 = vmatpush1.bf16.msra.mxu0 %v1095
    %1442 = vmatprep.mubr.bf16.mxu0 %v373
    %1443 = vmatmul.mubr.bf16.gmra.mrb[0].mxu0 %v372
    %v1444 = vpop.f32.mrb[0].mxu0
    %v1445 = vadd.f32 %v1402, %v1444
    %v1446 = vpop.f32.mrb[0].mxu0
    %v1447 = vadd.f32 %v1404, %v1446
    %v1448 = vpop.f32.mrb[0].mxu0
    %v1449 = vadd.f32 %v1406, %v1448
    %v1450 = vpop.f32.mrb[0].mxu0
    %v1451 = vadd.f32 %v1408, %v1450
    %1452 = vdwg.mxu0
    %1453 = vmatprep.subr.bf16.mxu0 %v1100
    %1454 = vmatpush1.bf16.msra.mxu0 %v1099
    %1455 = vmatprep.subr.bf16.mxu0 %v1104
    %1456 = vmatpush1.bf16.msra.mxu0 %v1103
    %1457 = vmatprep.subr.bf16.mxu0 %v1108
    %1458 = vmatpush1.bf16.msra.mxu0 %v1107
    %1459 = vmatprep.subr.bf16.mxu0 %v1112
    %1460 = vmatpush1.bf16.msra.mxu0 %v1111
    %1461 = vmatprep.subr.bf16.mxu0 %v1116
    %1462 = vmatpush1.bf16.msra.mxu0 %v1115
    %1463 = vmatprep.subr.bf16.mxu0 %v1120
    %1464 = vmatpush1.bf16.msra.mxu0 %v1119
    %1465 = vmatprep.subr.bf16.mxu0 %v1124
    %1466 = vmatpush1.bf16.msra.mxu0 %v1123
    %1467 = vmatprep.subr.bf16.mxu0 %v1128
    %1468 = vmatpush1.bf16.msra.mxu0 %v1127
    %1469 = vmatprep.subr.bf16.mxu0 %v1132
    %1470 = vmatpush1.bf16.msra.mxu0 %v1131
    %1471 = vmatprep.subr.bf16.mxu0 %v1136
    %1472 = vmatpush1.bf16.msra.mxu0 %v1135
    %1473 = vmatprep.subr.bf16.mxu0 %v1140
    %1474 = vmatpush1.bf16.msra.mxu0 %v1139
    %1475 = vmatprep.subr.bf16.mxu0 %v1144
    %1476 = vmatpush1.bf16.msra.mxu0 %v1143
    %1477 = vmatprep.subr.bf16.mxu0 %v1148
    %1478 = vmatpush1.bf16.msra.mxu0 %v1147
    %1479 = vmatprep.subr.bf16.mxu0 %v1152
    %1480 = vmatpush1.bf16.msra.mxu0 %v1151
    %1481 = vmatprep.subr.bf16.mxu0 %v1156
    %1482 = vmatpush1.bf16.msra.mxu0 %v1155
    %1483 = vmatprep.subr.bf16.mxu0 %v1160
    %1484 = vmatpush1.bf16.msra.mxu0 %v1159
    %1485 = vmatprep.mubr.bf16.mxu0 %v375
    %1486 = vmatmul.mubr.bf16.gmra.mrb[0].mxu0 %v374
    %v1487 = vpop.f32.mrb[0].mxu0
    %v1488 = vadd.f32 %v1445, %v1487
    %v1489 = vpop.f32.mrb[0].mxu0
    %v1490 = vadd.f32 %v1447, %v1489
    %v1491 = vpop.f32.mrb[0].mxu0
    %v1492 = vadd.f32 %v1449, %v1491
    %v1493 = vpop.f32.mrb[0].mxu0
    %v1494 = vadd.f32 %v1451, %v1493
    %1495 = vdwg.mxu0
    %1496 = vmatprep.subr.bf16.mxu0 %v1164
    %1497 = vmatpush1.bf16.msra.mxu0 %v1163
    %1498 = vmatprep.subr.bf16.mxu0 0
    %1499 = vmatpush1.bf16.msra.mxu0 0
    %1500 = vmatprep.subr.bf16.mxu0 0
    %1501 = vmatpush1.bf16.msra.mxu0 0
    %1502 = vmatprep.subr.bf16.mxu0 0
    %1503 = vmatpush1.bf16.msra.mxu0 0
    %1504 = vmatprep.subr.bf16.mxu0 0
    %1505 = vmatpush1.bf16.msra.mxu0 0
    %1506 = vmatprep.subr.bf16.mxu0 0
    %1507 = vmatpush1.bf16.msra.mxu0 0
    %1508 = vmatprep.subr.bf16.mxu0 0
    %1509 = vmatpush1.bf16.msra.mxu0 0
    %1510 = vmatprep.subr.bf16.mxu0 0
    %1511 = vmatpush1.bf16.msra.mxu0 0
    %1512 = vmatprep.subr.bf16.mxu0 0
    %1513 = vmatpush1.bf16.msra.mxu0 0
    %1514 = vmatprep.subr.bf16.mxu0 0
    %1515 = vmatpush1.bf16.msra.mxu0 0
    %1516 = vmatprep.subr.bf16.mxu0 0
    %1517 = vmatpush1.bf16.msra.mxu0 0
    %1518 = vmatprep.subr.bf16.mxu0 0
    %1519 = vmatpush1.bf16.msra.mxu0 0
    %1520 = vmatprep.subr.bf16.mxu0 0
    %1521 = vmatpush1.bf16.msra.mxu0 0
    %1522 = vmatprep.subr.bf16.mxu0 0
    %1523 = vmatpush1.bf16.msra.mxu0 0
    %1524 = vmatprep.subr.bf16.mxu0 0
    %1525 = vmatpush1.bf16.msra.mxu0 0
    %1526 = vmatprep.subr.bf16.mxu0 0
    %1527 = vmatpush1.bf16.msra.mxu0 0
    %1528 = vmatprep.mubr.bf16.mxu0 0
    %1529 = vmatmul.mubr.bf16.gmra.mrb[0].mxu0 %v1365
    %v1530 = vpop.f32.mrb[0].mxu0
    %v1531 = vadd.f32 %v1488, %v1530
    %v1532 = vpop.f32.mrb[0].mxu0
    %v1533 = vadd.f32 %v1490, %v1532
    %v1534 = vpop.f32.mrb[0].mxu0
    %v1535 = vadd.f32 %v1492, %v1534
    %v1536 = vpop.f32.mrb[0].mxu0
    %v1537 = vadd.f32 %v1494, %v1536
    %1538 = vdwg.mxu0
    %1539 = vmatprep.subr.bf16.mxu0 %v974
    %1540 = vmatpush1.bf16.msra.mxu0 %v973
    %1541 = vmatprep.subr.bf16.mxu0 %v978
    %1542 = vmatpush1.bf16.msra.mxu0 %v977
    %1543 = vmatprep.subr.bf16.mxu0 %v982
    %1544 = vmatpush1.bf16.msra.mxu0 %v981
    %1545 = vmatprep.subr.bf16.mxu0 %v986
    %1546 = vmatpush1.bf16.msra.mxu0 %v985
    %1547 = vmatprep.subr.bf16.mxu0 %v990
    %1548 = vmatpush1.bf16.msra.mxu0 %v989
    %1549 = vmatprep.subr.bf16.mxu0 %v994
    %1550 = vmatpush1.bf16.msra.mxu0 %v993
    %1551 = vmatprep.subr.bf16.mxu0 %v998
    %1552 = vmatpush1.bf16.msra.mxu0 %v997
    %1553 = vmatprep.subr.bf16.mxu0 %v1002
    %1554 = vmatpush1.bf16.msra.mxu0 %v1001
    %1555 = vmatprep.subr.bf16.mxu0 %v1006
    %1556 = vmatpush1.bf16.msra.mxu0 %v1005
    %1557 = vmatprep.subr.bf16.mxu0 %v1010
    %1558 = vmatpush1.bf16.msra.mxu0 %v1009
    %1559 = vmatprep.subr.bf16.mxu0 %v1014
    %1560 = vmatpush1.bf16.msra.mxu0 %v1013
    %1561 = vmatprep.subr.bf16.mxu0 %v1018
    %1562 = vmatpush1.bf16.msra.mxu0 %v1017
    %1563 = vmatprep.subr.bf16.mxu0 %v1022
    %1564 = vmatpush1.bf16.msra.mxu0 %v1021
    %1565 = vmatprep.subr.bf16.mxu0 %v1026
    %1566 = vmatpush1.bf16.msra.mxu0 %v1025
    %1567 = vmatprep.subr.bf16.mxu0 %v1030
    %1568 = vmatpush1.bf16.msra.mxu0 %v1029
    %1569 = vmatprep.subr.bf16.mxu0 %v1034
    %1570 = vmatpush1.bf16.msra.mxu0 %v1033
    %1571 = vmatprep.mubr.bf16.mxu0 %v371
    %1572 = vmatmul.mubr.bf16.gmra.mrb[0].mxu0 %v370
    %v1573 = vpop.f32.mrb[0].mxu0
    %v1574 = vadd.f32 %v339, %v1573
    %v1575 = vpop.f32.mrb[0].mxu0
    %v1576 = vadd.f32 %v343, %v1575
    %v1577 = vpop.f32.mrb[0].mxu0
    %v1578 = vadd.f32 %v339, %v1577
    %v1579 = vpop.f32.mrb[0].mxu0
    %v1580 = vadd.f32 %v343, %v1579
    %1581 = vdwg.mxu0
    %1582 = vmatprep.subr.bf16.mxu0 %v1038
    %1583 = vmatpush1.bf16.msra.mxu0 %v1037
    %1584 = vmatprep.subr.bf16.mxu0 %v1042
    %1585 = vmatpush1.bf16.msra.mxu0 %v1041
    %1586 = vmatprep.subr.bf16.mxu0 %v1046
    %1587 = vmatpush1.bf16.msra.mxu0 %v1045
    %1588 = vmatprep.subr.bf16.mxu0 %v1050
    %1589 = vmatpush1.bf16.msra.mxu0 %v1049
    %1590 = vmatprep.subr.bf16.mxu0 %v1054
    %1591 = vmatpush1.bf16.msra.mxu0 %v1053
    %1592 = vmatprep.subr.bf16.mxu0 %v1058
    %1593 = vmatpush1.bf16.msra.mxu0 %v1057
    %1594 = vmatprep.subr.bf16.mxu0 %v1062
    %1595 = vmatpush1.bf16.msra.mxu0 %v1061
    %1596 = vmatprep.subr.bf16.mxu0 %v1066
    %1597 = vmatpush1.bf16.msra.mxu0 %v1065
    %1598 = vmatprep.subr.bf16.mxu0 %v1070
    %1599 = vmatpush1.bf16.msra.mxu0 %v1069
    %1600 = vmatprep.subr.bf16.mxu0 %v1074
    %1601 = vmatpush1.bf16.msra.mxu0 %v1073
    %1602 = vmatprep.subr.bf16.mxu0 %v1078
    %1603 = vmatpush1.bf16.msra.mxu0 %v1077
    %1604 = vmatprep.subr.bf16.mxu0 %v1082
    %1605 = vmatpush1.bf16.msra.mxu0 %v1081
    %1606 = vmatprep.subr.bf16.mxu0 %v1086
    %1607 = vmatpush1.bf16.msra.mxu0 %v1085
    %1608 = vmatprep.subr.bf16.mxu0 %v1090
    %1609 = vmatpush1.bf16.msra.mxu0 %v1089
    %1610 = vmatprep.subr.bf16.mxu0 %v1094
    %1611 = vmatpush1.bf16.msra.mxu0 %v1093
    %1612 = vmatprep.subr.bf16.mxu0 %v1098
    %1613 = vmatpush1.bf16.msra.mxu0 %v1097
    %1614 = vmatprep.mubr.bf16.mxu0 %v373
    %1615 = vmatmul.mubr.bf16.gmra.mrb[0].mxu0 %v372
    %v1616 = vpop.f32.mrb[0].mxu0
    %v1617 = vadd.f32 %v1574, %v1616
    %v1618 = vpop.f32.mrb[0].mxu0
    %v1619 = vadd.f32 %v1576, %v1618
    %v1620 = vpop.f32.mrb[0].mxu0
    %v1621 = vadd.f32 %v1578, %v1620
    %v1622 = vpop.f32.mrb[0].mxu0
    %v1623 = vadd.f32 %v1580, %v1622
    %1624 = vdwg.mxu0
    %1625 = vmatprep.subr.bf16.mxu0 %v1102
    %1626 = vmatpush1.bf16.msra.mxu0 %v1101
    %1627 = vmatprep.subr.bf16.mxu0 %v1106
    %1628 = vmatpush1.bf16.msra.mxu0 %v1105
    %1629 = vmatprep.subr.bf16.mxu0 %v1110
    %1630 = vmatpush1.bf16.msra.mxu0 %v1109
    %1631 = vmatprep.subr.bf16.mxu0 %v1114
    %1632 = vmatpush1.bf16.msra.mxu0 %v1113
    %1633 = vmatprep.subr.bf16.mxu0 %v1118
    %1634 = vmatpush1.bf16.msra.mxu0 %v1117
    %1635 = vmatprep.subr.bf16.mxu0 %v1122
    %1636 = vmatpush1.bf16.msra.mxu0 %v1121
    %1637 = vmatprep.subr.bf16.mxu0 %v1126
    %1638 = vmatpush1.bf16.msra.mxu0 %v1125
    %1639 = vmatprep.subr.bf16.mxu0 %v1130
    %1640 = vmatpush1.bf16.msra.mxu0 %v1129
    %1641 = vmatprep.subr.bf16.mxu0 %v1134
    %1642 = vmatpush1.bf16.msra.mxu0 %v1133
    %1643 = vmatprep.subr.bf16.mxu0 %v1138
    %1644 = vmatpush1.bf16.msra.mxu0 %v1137
    %1645 = vmatprep.subr.bf16.mxu0 %v1142
    %1646 = vmatpush1.bf16.msra.mxu0 %v1141
    %1647 = vmatprep.subr.bf16.mxu0 %v1146
    %1648 = vmatpush1.bf16.msra.mxu0 %v1145
    %1649 = vmatprep.subr.bf16.mxu0 %v1150
    %1650 = vmatpush1.bf16.msra.mxu0 %v1149
    %1651 = vmatprep.subr.bf16.mxu0 %v1154
    %1652 = vmatpush1.bf16.msra.mxu0 %v1153
    %1653 = vmatprep.subr.bf16.mxu0 %v1158
    %1654 = vmatpush1.bf16.msra.mxu0 %v1157
    %1655 = vmatprep.subr.bf16.mxu0 %v1162
    %1656 = vmatpush1.bf16.msra.mxu0 %v1161
    %1657 = vmatprep.mubr.bf16.mxu0 %v375
    %1658 = vmatmul.mubr.bf16.gmra.mrb[0].mxu0 %v374
    %v1659 = vpop.f32.mrb[0].mxu0
    %v1660 = vadd.f32 %v1617, %v1659
    %v1661 = vpop.f32.mrb[0].mxu0
    %v1662 = vadd.f32 %v1619, %v1661
    %v1663 = vpop.f32.mrb[0].mxu0
    %v1664 = vadd.f32 %v1621, %v1663
    %v1665 = vpop.f32.mrb[0].mxu0
    %v1666 = vadd.f32 %v1623, %v1665
    %1667 = vdwg.mxu0
    %1668 = vmatprep.subr.bf16.mxu0 %v1166
    %1669 = vmatpush1.bf16.msra.mxu0 %v1165
    %1670 = vmatprep.subr.bf16.mxu0 0
    %1671 = vmatpush1.bf16.msra.mxu0 0
    %1672 = vmatprep.subr.bf16.mxu0 0
    %1673 = vmatpush1.bf16.msra.mxu0 0
    %1674 = vmatprep.subr.bf16.mxu0 0
    %1675 = vmatpush1.bf16.msra.mxu0 0
    %1676 = vmatprep.subr.bf16.mxu0 0
    %1677 = vmatpush1.bf16.msra.mxu0 0
    %1678 = vmatprep.subr.bf16.mxu0 0
    %1679 = vmatpush1.bf16.msra.mxu0 0
    %1680 = vmatprep.subr.bf16.mxu0 0
    %1681 = vmatpush1.bf16.msra.mxu0 0
    %1682 = vmatprep.subr.bf16.mxu0 0
    %1683 = vmatpush1.bf16.msra.mxu0 0
    %1684 = vmatprep.subr.bf16.mxu0 0
    %1685 = vmatpush1.bf16.msra.mxu0 0
    %1686 = vmatprep.subr.bf16.mxu0 0
    %1687 = vmatpush1.bf16.msra.mxu0 0
    %1688 = vmatprep.subr.bf16.mxu0 0
    %1689 = vmatpush1.bf16.msra.mxu0 0
    %1690 = vmatprep.subr.bf16.mxu0 0
    %1691 = vmatpush1.bf16.msra.mxu0 0
    %1692 = vmatprep.subr.bf16.mxu0 0
    %1693 = vmatpush1.bf16.msra.mxu0 0
    %1694 = vmatprep.subr.bf16.mxu0 0
    %1695 = vmatpush1.bf16.msra.mxu0 0
    %1696 = vmatprep.subr.bf16.mxu0 0
    %1697 = vmatpush1.bf16.msra.mxu0 0
    %1698 = vmatprep.subr.bf16.mxu0 0
    %1699 = vmatpush1.bf16.msra.mxu0 0
    %1700 = vmatprep.mubr.bf16.mxu0 0
    %1701 = vmatmul.mubr.bf16.gmra.mrb[0].mxu0 %v1365
    %v1702 = vpop.f32.mrb[0].mxu0
    %v1703 = vadd.f32 %v1660, %v1702
    %v1704 = vpop.f32.mrb[0].mxu0
    %v1705 = vadd.f32 %v1662, %v1704
    %v1706 = vpop.f32.mrb[0].mxu0
    %v1707 = vadd.f32 %v1664, %v1706
    %v1708 = vpop.f32.mrb[0].mxu0
    %v1709 = vadd.f32 %v1666, %v1708
    %1710 = vdwg.mxu0
    %v1711 = vmax.f32 %v1531, 0.0
    %v1712 = vmax.f32 %v1533, 0.0
    %v1713 = vmax.f32 %v1703, 0.0
    %v1714 = vmax.f32 %v1705, 0.0
    %v1715 = vmax.f32 %v1535, 0.0
    %v1716 = vmax.f32 %v1537, 0.0
    %v1717 = vmax.f32 %v1707, 0.0
    %v1718 = vmax.f32 %v1709, 0.0
    %v1719 = vpack.c.bf16 %v1715, %v1711
    %v1720 = vpack.c.bf16 %v1716, %v1712
    %v1721 = vpack.c.bf16 %v1717, %v1713
    %v1722 = vpack.c.bf16 %v1718, %v1714
    %v1723 = vld [vmem:[#allocation7] sm:$0xff]
    %v1724 = vld [vmem:[#allocation7 + $0x8] sm:$0xff]
    %v1725 = vld [vmem:[#allocation7 + $0x10] sm:$0xff]
    %v1726 = vld [vmem:[#allocation7 + $0x18] sm:$0xff]
    %v1727 = vld [vmem:[#allocation7 + $0x20] sm:$0xff]
    %v1728 = vld [vmem:[#allocation7 + $0x28] sm:$0xff]
    %v1729 = vld [vmem:[#allocation7 + $0x30] sm:$0xff]
    %v1730 = vld [vmem:[#allocation7 + $0x38] sm:$0xff]
    %v1731 = vld [vmem:[#allocation7 + $0x40] sm:$0xff]
    %v1732 = vld [vmem:[#allocation7 + $0x48] sm:$0xff]
    %v1733 = vld [vmem:[#allocation7 + $0x50] sm:$0xff]
    %v1734 = vld [vmem:[#allocation7 + $0x58] sm:$0xff]
    %v1735 = vld [vmem:[#allocation7 + $0x60] sm:$0xff]
    %v1736 = vld [vmem:[#allocation7 + $0x68] sm:$0xff]
    %v1737 = vld [vmem:[#allocation7 + $0x70] sm:$0xff]
    %v1738 = vld [vmem:[#allocation7 + $0x78] sm:$0xff]
    %v1739 = vld [vmem:[#allocation7 + $0x80] sm:$0xff]
    %v1740 = vld [vmem:[#allocation7 + $0x88] sm:$0xff]
    %v1741 = vld [vmem:[#allocation7 + $0x90] sm:$0xff]
    %v1742 = vld [vmem:[#allocation7 + $0x98] sm:$0xff]
    %v1743 = vld [vmem:[#allocation7 + $0xa0] sm:$0xff]
    %v1744 = vld [vmem:[#allocation7 + $0xa8] sm:$0xff]
    %v1745 = vld [vmem:[#allocation7 + $0xb0] sm:$0xff]
    %v1746 = vld [vmem:[#allocation7 + $0xb8] sm:$0xff]
    %v1747 = vld [vmem:[#allocation7 + $0xc0] sm:$0xff]
    %v1748 = vld [vmem:[#allocation7 + $0xc8] sm:$0xff]
    %v1749 = vld [vmem:[#allocation7 + $0xd0] sm:$0xff]
    %v1750 = vld [vmem:[#allocation7 + $0xd8] sm:$0xff]
    %v1751 = vld [vmem:[#allocation7 + $0xe0] sm:$0xff]
    %v1752 = vld [vmem:[#allocation7 + $0xe8] sm:$0xff]
    %v1753 = vld [vmem:[#allocation7 + $0xf0] sm:$0xff]
    %v1754 = vld [vmem:[#allocation7 + $0xf8] sm:$0xff]
    %v1755 = vld [vmem:[#allocation7 + $0x100] sm:$0xff]
    %v1756 = vld [vmem:[#allocation7 + $0x108] sm:$0xff]
    %v1757 = vld [vmem:[#allocation7 + $0x110] sm:$0xff]
    %v1758 = vld [vmem:[#allocation7 + $0x118] sm:$0xff]
    %v1759 = vld [vmem:[#allocation7 + $0x120] sm:$0xff]
    %v1760 = vld [vmem:[#allocation7 + $0x128] sm:$0xff]
    %v1761 = vld [vmem:[#allocation7 + $0x130] sm:$0xff]
    %v1762 = vld [vmem:[#allocation7 + $0x138] sm:$0xff]
    %v1763 = vld [vmem:[#allocation7 + $0x140] sm:$0xff]
    %v1764 = vld [vmem:[#allocation7 + $0x148] sm:$0xff]
    %v1765 = vld [vmem:[#allocation7 + $0x150] sm:$0xff]
    %v1766 = vld [vmem:[#allocation7 + $0x158] sm:$0xff]
    %v1767 = vld [vmem:[#allocation7 + $0x160] sm:$0xff]
    %v1768 = vld [vmem:[#allocation7 + $0x168] sm:$0xff]
    %v1769 = vld [vmem:[#allocation7 + $0x170] sm:$0xff]
    %v1770 = vld [vmem:[#allocation7 + $0x178] sm:$0xff]
    %v1771 = vld [vmem:[#allocation7 + $0x180] sm:$0xff]
    %v1772 = vld [vmem:[#allocation7 + $0x188] sm:$0xff]
    %v1773 = vld [vmem:[#allocation7 + $0x190] sm:$0xff]
    %v1774 = vld [vmem:[#allocation7 + $0x198] sm:$0xff]
    %v1775 = vld [vmem:[#allocation7 + $0x1a0] sm:$0xff]
    %v1776 = vld [vmem:[#allocation7 + $0x1a8] sm:$0xff]
    %v1777 = vld [vmem:[#allocation7 + $0x1b0] sm:$0xff]
    %v1778 = vld [vmem:[#allocation7 + $0x1b8] sm:$0xff]
    %v1779 = vld [vmem:[#allocation7 + $0x1c0] sm:$0xff]
    %v1780 = vld [vmem:[#allocation7 + $0x1c8] sm:$0xff]
    %v1781 = vld [vmem:[#allocation7 + $0x1d0] sm:$0xff]
    %v1782 = vld [vmem:[#allocation7 + $0x1d8] sm:$0xff]
    %v1783 = vld [vmem:[#allocation7 + $0x1e0] sm:$0xff]
    %v1784 = vld [vmem:[#allocation7 + $0x1e8] sm:$0xff]
    %v1785 = vld [vmem:[#allocation7 + $0x1f0] sm:$0xff]
    %v1786 = vld [vmem:[#allocation7 + $0x1f8] sm:$0xff]
    %v1787 = vld [vmem:[%s4] sm:$0x3]
    %v1789 = vlaneseq
    %v1790 = vshrl.u32 %v1789, 7
    %v1791 = vsub.s32 0, %v1790
    %v1792 = vrot.slane %v1787, %v1791
    %v1793 = vlaneseq
    %v1794 = vshrl.u32 %v1793, 7
    %v1795 = vsub.s32 1, %v1794
    %v1796 = vrot.slane %v1787, %v1795
    %v1863 = vunpack.c.l.b16 %v1723
    %v1864 = vunpack.c.h.b16 %v1723
    %v1865 = vunpack.c.l.b16 %v1724
    %v1866 = vunpack.c.h.b16 %v1724
    %v1867 = vunpack.c.l.b16 %v1725
    %v1868 = vunpack.c.h.b16 %v1725
    %v1869 = vunpack.c.l.b16 %v1726
    %v1870 = vunpack.c.h.b16 %v1726
    %v1871 = vunpack.c.l.b16 %v1727
    %v1872 = vunpack.c.h.b16 %v1727
    %v1873 = vunpack.c.l.b16 %v1728
    %v1874 = vunpack.c.h.b16 %v1728
    %v1875 = vunpack.c.l.b16 %v1729
    %v1876 = vunpack.c.h.b16 %v1729
    %v1877 = vunpack.c.l.b16 %v1730
    %v1878 = vunpack.c.h.b16 %v1730
    %v1879 = vunpack.c.l.b16 %v1731
    %v1880 = vunpack.c.h.b16 %v1731
    %v1881 = vunpack.c.l.b16 %v1732
    %v1882 = vunpack.c.h.b16 %v1732
    %v1883 = vunpack.c.l.b16 %v1733
    %v1884 = vunpack.c.h.b16 %v1733
    %v1885 = vunpack.c.l.b16 %v1734
    %v1886 = vunpack.c.h.b16 %v1734
    %v1887 = vunpack.c.l.b16 %v1735
    %v1888 = vunpack.c.h.b16 %v1735
    %v1889 = vunpack.c.l.b16 %v1736
    %v1890 = vunpack.c.h.b16 %v1736
    %v1891 = vunpack.c.l.b16 %v1737
    %v1892 = vunpack.c.h.b16 %v1737
    %v1893 = vunpack.c.l.b16 %v1738
    %v1894 = vunpack.c.h.b16 %v1738
    %v1895 = vunpack.c.l.b16 %v1739
    %v1896 = vunpack.c.h.b16 %v1739
    %v1897 = vunpack.c.l.b16 %v1740
    %v1898 = vunpack.c.h.b16 %v1740
    %v1899 = vunpack.c.l.b16 %v1741
    %v1900 = vunpack.c.h.b16 %v1741
    %v1901 = vunpack.c.l.b16 %v1742
    %v1902 = vunpack.c.h.b16 %v1742
    %v1903 = vunpack.c.l.b16 %v1743
    %v1904 = vunpack.c.h.b16 %v1743
    %v1905 = vunpack.c.l.b16 %v1744
    %v1906 = vunpack.c.h.b16 %v1744
    %v1907 = vunpack.c.l.b16 %v1745
    %v1908 = vunpack.c.h.b16 %v1745
    %v1909 = vunpack.c.l.b16 %v1746
    %v1910 = vunpack.c.h.b16 %v1746
    %v1911 = vunpack.c.l.b16 %v1747
    %v1912 = vunpack.c.h.b16 %v1747
    %v1913 = vunpack.c.l.b16 %v1748
    %v1914 = vunpack.c.h.b16 %v1748
    %v1915 = vunpack.c.l.b16 %v1749
    %v1916 = vunpack.c.h.b16 %v1749
    %v1917 = vunpack.c.l.b16 %v1750
    %v1918 = vunpack.c.h.b16 %v1750
    %v1919 = vunpack.c.l.b16 %v1751
    %v1920 = vunpack.c.h.b16 %v1751
    %v1921 = vunpack.c.l.b16 %v1752
    %v1922 = vunpack.c.h.b16 %v1752
    %v1923 = vunpack.c.l.b16 %v1753
    %v1924 = vunpack.c.h.b16 %v1753
    %v1925 = vunpack.c.l.b16 %v1754
    %v1926 = vunpack.c.h.b16 %v1754
    %v1927 = vunpack.c.l.b16 %v1755
    %v1928 = vunpack.c.h.b16 %v1755
    %v1929 = vunpack.c.l.b16 %v1756
    %v1930 = vunpack.c.h.b16 %v1756
    %v1931 = vunpack.c.l.b16 %v1757
    %v1932 = vunpack.c.h.b16 %v1757
    %v1933 = vunpack.c.l.b16 %v1758
    %v1934 = vunpack.c.h.b16 %v1758
    %v1935 = vunpack.c.l.b16 %v1759
    %v1936 = vunpack.c.h.b16 %v1759
    %v1937 = vunpack.c.l.b16 %v1760
    %v1938 = vunpack.c.h.b16 %v1760
    %v1939 = vunpack.c.l.b16 %v1761
    %v1940 = vunpack.c.h.b16 %v1761
    %v1941 = vunpack.c.l.b16 %v1762
    %v1942 = vunpack.c.h.b16 %v1762
    %v1943 = vunpack.c.l.b16 %v1763
    %v1944 = vunpack.c.h.b16 %v1763
    %v1945 = vunpack.c.l.b16 %v1764
    %v1946 = vunpack.c.h.b16 %v1764
    %v1947 = vunpack.c.l.b16 %v1765
    %v1948 = vunpack.c.h.b16 %v1765
    %v1949 = vunpack.c.l.b16 %v1766
    %v1950 = vunpack.c.h.b16 %v1766
    %v1951 = vunpack.c.l.b16 %v1767
    %v1952 = vunpack.c.h.b16 %v1767
    %v1953 = vunpack.c.l.b16 %v1768
    %v1954 = vunpack.c.h.b16 %v1768
    %v1955 = vunpack.c.l.b16 %v1769
    %v1956 = vunpack.c.h.b16 %v1769
    %v1957 = vunpack.c.l.b16 %v1770
    %v1958 = vunpack.c.h.b16 %v1770
    %v1959 = vunpack.c.l.b16 %v1771
    %v1960 = vunpack.c.h.b16 %v1771
    %v1961 = vunpack.c.l.b16 %v1772
    %v1962 = vunpack.c.h.b16 %v1772
    %v1963 = vunpack.c.l.b16 %v1773
    %v1964 = vunpack.c.h.b16 %v1773
    %v1965 = vunpack.c.l.b16 %v1774
    %v1966 = vunpack.c.h.b16 %v1774
    %v1967 = vunpack.c.l.b16 %v1775
    %v1968 = vunpack.c.h.b16 %v1775
    %v1969 = vunpack.c.l.b16 %v1776
    %v1970 = vunpack.c.h.b16 %v1776
    %v1971 = vunpack.c.l.b16 %v1777
    %v1972 = vunpack.c.h.b16 %v1777
    %v1973 = vunpack.c.l.b16 %v1778
    %v1974 = vunpack.c.h.b16 %v1778
    %v1975 = vunpack.c.l.b16 %v1779
    %v1976 = vunpack.c.h.b16 %v1779
    %v1977 = vunpack.c.l.b16 %v1780
    %v1978 = vunpack.c.h.b16 %v1780
    %v1979 = vunpack.c.l.b16 %v1781
    %v1980 = vunpack.c.h.b16 %v1781
    %v1981 = vunpack.c.l.b16 %v1782
    %v1982 = vunpack.c.h.b16 %v1782
    %v1983 = vunpack.c.l.b16 %v1783
    %v1984 = vunpack.c.h.b16 %v1783
    %v1985 = vunpack.c.l.b16 %v1784
    %v1986 = vunpack.c.h.b16 %v1784
    %v1987 = vunpack.c.l.b16 %v1785
    %v1988 = vunpack.c.h.b16 %v1785
    %v1989 = vunpack.c.l.b16 %v1786
    %v1990 = vunpack.c.h.b16 %v1786
    %v1991 = vpack.c.b16 %v1865, %v1863
    %v1992 = vpack.c.b16 %v1866, %v1864
    %v1993 = vpack.c.b16 %v1869, %v1867
    %v1994 = vpack.c.b16 %v1870, %v1868
    %v1995 = vpack.c.b16 %v1873, %v1871
    %v1996 = vpack.c.b16 %v1874, %v1872
    %v1997 = vpack.c.b16 %v1877, %v1875
    %v1998 = vpack.c.b16 %v1878, %v1876
    %v1999 = vpack.c.b16 %v1881, %v1879
    %v2000 = vpack.c.b16 %v1882, %v1880
    %v2001 = vpack.c.b16 %v1885, %v1883
    %v2002 = vpack.c.b16 %v1886, %v1884
    %v2003 = vpack.c.b16 %v1889, %v1887
    %v2004 = vpack.c.b16 %v1890, %v1888
    %v2005 = vpack.c.b16 %v1893, %v1891
    %v2006 = vpack.c.b16 %v1894, %v1892
    %v2007 = vpack.c.b16 %v1897, %v1895
    %v2008 = vpack.c.b16 %v1898, %v1896
    %v2009 = vpack.c.b16 %v1901, %v1899
    %v2010 = vpack.c.b16 %v1902, %v1900
    %v2011 = vpack.c.b16 %v1905, %v1903
    %v2012 = vpack.c.b16 %v1906, %v1904
    %v2013 = vpack.c.b16 %v1909, %v1907
    %v2014 = vpack.c.b16 %v1910, %v1908
    %v2015 = vpack.c.b16 %v1913, %v1911
    %v2016 = vpack.c.b16 %v1914, %v1912
    %v2017 = vpack.c.b16 %v1917, %v1915
    %v2018 = vpack.c.b16 %v1918, %v1916
    %v2019 = vpack.c.b16 %v1921, %v1919
    %v2020 = vpack.c.b16 %v1922, %v1920
    %v2021 = vpack.c.b16 %v1925, %v1923
    %v2022 = vpack.c.b16 %v1926, %v1924
    %v2023 = vpack.c.b16 %v1929, %v1927
    %v2024 = vpack.c.b16 %v1930, %v1928
    %v2025 = vpack.c.b16 %v1933, %v1931
    %v2026 = vpack.c.b16 %v1934, %v1932
    %v2027 = vpack.c.b16 %v1937, %v1935
    %v2028 = vpack.c.b16 %v1938, %v1936
    %v2029 = vpack.c.b16 %v1941, %v1939
    %v2030 = vpack.c.b16 %v1942, %v1940
    %v2031 = vpack.c.b16 %v1945, %v1943
    %v2032 = vpack.c.b16 %v1946, %v1944
    %v2033 = vpack.c.b16 %v1949, %v1947
    %v2034 = vpack.c.b16 %v1950, %v1948
    %v2035 = vpack.c.b16 %v1953, %v1951
    %v2036 = vpack.c.b16 %v1954, %v1952
    %v2037 = vpack.c.b16 %v1957, %v1955
    %v2038 = vpack.c.b16 %v1958, %v1956
    %v2039 = vpack.c.b16 %v1961, %v1959
    %v2040 = vpack.c.b16 %v1962, %v1960
    %v2041 = vpack.c.b16 %v1965, %v1963
    %v2042 = vpack.c.b16 %v1966, %v1964
    %v2043 = vpack.c.b16 %v1969, %v1967
    %v2044 = vpack.c.b16 %v1970, %v1968
    %v2045 = vpack.c.b16 %v1973, %v1971
    %v2046 = vpack.c.b16 %v1974, %v1972
    %v2047 = vpack.c.b16 %v1977, %v1975
    %v2048 = vpack.c.b16 %v1978, %v1976
    %v2049 = vpack.c.b16 %v1981, %v1979
    %v2050 = vpack.c.b16 %v1982, %v1980
    %v2051 = vpack.c.b16 %v1985, %v1983
    %v2052 = vpack.c.b16 %v1986, %v1984
    %v2053 = vpack.c.b16 %v1989, %v1987
    %v2054 = vpack.c.b16 %v1990, %v1988
    %2119 = vmatprep.subr.bf16.mxu0 %v1992
    %2120 = vmatpush1.bf16.msra.mxu0 %v1991
    %2121 = vmatprep.subr.bf16.mxu0 %v1994
    %2122 = vmatpush1.bf16.msra.mxu0 %v1993
    %2123 = vmatprep.subr.bf16.mxu0 %v1996
    %2124 = vmatpush1.bf16.msra.mxu0 %v1995
    %2125 = vmatprep.subr.bf16.mxu0 %v1998
    %2126 = vmatpush1.bf16.msra.mxu0 %v1997
    %2127 = vmatprep.subr.bf16.mxu0 %v2000
    %2128 = vmatpush1.bf16.msra.mxu0 %v1999
    %2129 = vmatprep.subr.bf16.mxu0 %v2002
    %2130 = vmatpush1.bf16.msra.mxu0 %v2001
    %2131 = vmatprep.subr.bf16.mxu0 %v2004
    %2132 = vmatpush1.bf16.msra.mxu0 %v2003
    %2133 = vmatprep.subr.bf16.mxu0 %v2006
    %2134 = vmatpush1.bf16.msra.mxu0 %v2005
    %2135 = vmatprep.subr.bf16.mxu0 %v2008
    %2136 = vmatpush1.bf16.msra.mxu0 %v2007
    %2137 = vmatprep.subr.bf16.mxu0 %v2010
    %2138 = vmatpush1.bf16.msra.mxu0 %v2009
    %2139 = vmatprep.subr.bf16.mxu0 %v2012
    %2140 = vmatpush1.bf16.msra.mxu0 %v2011
    %2141 = vmatprep.subr.bf16.mxu0 %v2014
    %2142 = vmatpush1.bf16.msra.mxu0 %v2013
    %2143 = vmatprep.subr.bf16.mxu0 %v2016
    %2144 = vmatpush1.bf16.msra.mxu0 %v2015
    %2145 = vmatprep.subr.bf16.mxu0 %v2018
    %2146 = vmatpush1.bf16.msra.mxu0 %v2017
    %2147 = vmatprep.subr.bf16.mxu0 %v2020
    %2148 = vmatpush1.bf16.msra.mxu0 %v2019
    %2149 = vmatprep.subr.bf16.mxu0 %v2022
    %2150 = vmatpush1.bf16.msra.mxu0 %v2021
    %2151 = vmatprep.mubr.bf16.mxu0 %v1720
    %2152 = vmatmul.mubr.bf16.gmra.mrb[0].mxu0 %v1719
    %v2153 = vpop.f32.mrb[0].mxu0
    %v2154 = vadd.f32 %v1792, %v2153
    %v2155 = vpop.f32.mrb[0].mxu0
    %v2156 = vadd.f32 %v1796, %v2155
    %v2157 = vpop.f32.mrb[0].mxu0
    %v2158 = vadd.f32 %v1792, %v2157
    %v2159 = vpop.f32.mrb[0].mxu0
    %v2160 = vadd.f32 %v1796, %v2159
    %2161 = vdwg.mxu0
    %2162 = vmatprep.subr.bf16.mxu0 %v2024
    %2163 = vmatpush1.bf16.msra.mxu0 %v2023
    %2164 = vmatprep.subr.bf16.mxu0 %v2026
    %2165 = vmatpush1.bf16.msra.mxu0 %v2025
    %2166 = vmatprep.subr.bf16.mxu0 %v2028
    %2167 = vmatpush1.bf16.msra.mxu0 %v2027
    %2168 = vmatprep.subr.bf16.mxu0 %v2030
    %2169 = vmatpush1.bf16.msra.mxu0 %v2029
    %2170 = vmatprep.subr.bf16.mxu0 %v2032
    %2171 = vmatpush1.bf16.msra.mxu0 %v2031
    %2172 = vmatprep.subr.bf16.mxu0 %v2034
    %2173 = vmatpush1.bf16.msra.mxu0 %v2033
    %2174 = vmatprep.subr.bf16.mxu0 %v2036
    %2175 = vmatpush1.bf16.msra.mxu0 %v2035
    %2176 = vmatprep.subr.bf16.mxu0 %v2038
    %2177 = vmatpush1.bf16.msra.mxu0 %v2037
    %2178 = vmatprep.subr.bf16.mxu0 %v2040
    %2179 = vmatpush1.bf16.msra.mxu0 %v2039
    %2180 = vmatprep.subr.bf16.mxu0 %v2042
    %2181 = vmatpush1.bf16.msra.mxu0 %v2041
    %2182 = vmatprep.subr.bf16.mxu0 %v2044
    %2183 = vmatpush1.bf16.msra.mxu0 %v2043
    %2184 = vmatprep.subr.bf16.mxu0 %v2046
    %2185 = vmatpush1.bf16.msra.mxu0 %v2045
    %2186 = vmatprep.subr.bf16.mxu0 %v2048
    %2187 = vmatpush1.bf16.msra.mxu0 %v2047
    %2188 = vmatprep.subr.bf16.mxu0 %v2050
    %2189 = vmatpush1.bf16.msra.mxu0 %v2049
    %2190 = vmatprep.subr.bf16.mxu0 %v2052
    %2191 = vmatpush1.bf16.msra.mxu0 %v2051
    %2192 = vmatprep.subr.bf16.mxu0 %v2054
    %2193 = vmatpush1.bf16.msra.mxu0 %v2053
    %2194 = vmatprep.mubr.bf16.mxu0 %v1722
    %2195 = vmatmul.mubr.bf16.gmra.mrb[0].mxu0 %v1721
    %v2196 = vpop.f32.mrb[0].mxu0
    %v2197 = vadd.f32 %v2154, %v2196
    %v2198 = vpop.f32.mrb[0].mxu0
    %v2199 = vadd.f32 %v2156, %v2198
    %v2200 = vpop.f32.mrb[0].mxu0
    %v2201 = vadd.f32 %v2158, %v2200
    %v2202 = vpop.f32.mrb[0].mxu0
    %v2203 = vadd.f32 %v2160, %v2202
    %2204 = vdwg.mxu0
    %v2205 = vmax.f32 %v2197, 0.0
    %v2206 = vmax.f32 %v2199, 0.0
    %v2207 = vmax.f32 %v2201, 0.0
    %v2208 = vmax.f32 %v2203, 0.0
    %v2209 = vpack.c.bf16 %v2207, %v2205
    %v2210 = vpack.c.bf16 %v2208, %v2206
    %v2211 = vld [vmem:[#allocation8] sm:$0xf]
    %v2212 = vld [vmem:[#allocation8 + $0x4] sm:$0xf]
    %v2213 = vld [vmem:[#allocation8 + $0x8] sm:$0xf]
    %v2214 = vld [vmem:[#allocation8 + $0xc] sm:$0xf]
    %v2215 = vld [vmem:[#allocation8 + $0x10] sm:$0xf]
    %v2216 = vld [vmem:[#allocation8 + $0x14] sm:$0xf]
    %v2217 = vld [vmem:[#allocation8 + $0x18] sm:$0xf]
    %v2218 = vld [vmem:[#allocation8 + $0x1c] sm:$0xf]
    %v2219 = vld [vmem:[#allocation8 + $0x20] sm:$0xf]
    %v2220 = vld [vmem:[#allocation8 + $0x24] sm:$0xf]
    %v2221 = vld [vmem:[#allocation8 + $0x28] sm:$0xf]
    %v2222 = vld [vmem:[#allocation8 + $0x2c] sm:$0xf]
    %v2223 = vld [vmem:[#allocation8 + $0x30] sm:$0xf]
    %v2224 = vld [vmem:[#allocation8 + $0x34] sm:$0xf]
    %v2225 = vld [vmem:[#allocation8 + $0x38] sm:$0xf]
    %v2226 = vld [vmem:[#allocation8 + $0x3c] sm:$0xf]
    %v2227 = vld [vmem:[#allocation8 + $0x40] sm:$0xf]
    %v2228 = vld [vmem:[#allocation8 + $0x44] sm:$0xf]
    %v2229 = vld [vmem:[#allocation8 + $0x48] sm:$0xf]
    %v2230 = vld [vmem:[#allocation8 + $0x4c] sm:$0xf]
    %v2231 = vld [vmem:[#allocation8 + $0x50] sm:$0xf]
    %v2232 = vld [vmem:[#allocation8 + $0x54] sm:$0xf]
    %v2233 = vld [vmem:[#allocation8 + $0x58] sm:$0xf]
    %v2234 = vld [vmem:[#allocation8 + $0x5c] sm:$0xf]
    %v2235 = vld [vmem:[#allocation8 + $0x60] sm:$0xf]
    %v2236 = vld [vmem:[#allocation8 + $0x64] sm:$0xf]
    %v2237 = vld [vmem:[#allocation8 + $0x68] sm:$0xf]
    %v2238 = vld [vmem:[#allocation8 + $0x6c] sm:$0xf]
    %v2239 = vld [vmem:[#allocation8 + $0x70] sm:$0xf]
    %v2240 = vld [vmem:[#allocation8 + $0x74] sm:$0xf]
    %v2241 = vld [vmem:[#allocation8 + $0x78] sm:$0xf]
    %v2242 = vld [vmem:[#allocation8 + $0x7c] sm:$0xf]
    %v2243 = vld [vmem:[%s6] sm:$0x1]
    %v2245 = vlaneseq
    %v2246 = vshrl.u32 %v2245, 7
    %v2247 = vsub.s32 0, %v2246
    %v2248 = vrot.slane %v2243, %v2247
    %v2282 = vunpack.c.l.b16 %v2211
    %v2283 = vunpack.c.l.b16 %v2212
    %v2284 = vunpack.c.l.b16 %v2213
    %v2285 = vunpack.c.l.b16 %v2214
    %v2286 = vunpack.c.l.b16 %v2215
    %v2287 = vunpack.c.l.b16 %v2216
    %v2288 = vunpack.c.l.b16 %v2217
    %v2289 = vunpack.c.l.b16 %v2218
    %v2290 = vunpack.c.l.b16 %v2219
    %v2291 = vunpack.c.l.b16 %v2220
    %v2292 = vunpack.c.l.b16 %v2221
    %v2293 = vunpack.c.l.b16 %v2222
    %v2294 = vunpack.c.l.b16 %v2223
    %v2295 = vunpack.c.l.b16 %v2224
    %v2296 = vunpack.c.l.b16 %v2225
    %v2297 = vunpack.c.l.b16 %v2226
    %v2298 = vunpack.c.l.b16 %v2227
    %v2299 = vunpack.c.l.b16 %v2228
    %v2300 = vunpack.c.l.b16 %v2229
    %v2301 = vunpack.c.l.b16 %v2230
    %v2302 = vunpack.c.l.b16 %v2231
    %v2303 = vunpack.c.l.b16 %v2232
    %v2304 = vunpack.c.l.b16 %v2233
    %v2305 = vunpack.c.l.b16 %v2234
    %v2306 = vunpack.c.l.b16 %v2235
    %v2307 = vunpack.c.l.b16 %v2236
    %v2308 = vunpack.c.l.b16 %v2237
    %v2309 = vunpack.c.l.b16 %v2238
    %v2310 = vunpack.c.l.b16 %v2239
    %v2311 = vunpack.c.l.b16 %v2240
    %v2312 = vunpack.c.l.b16 %v2241
    %v2313 = vunpack.c.l.b16 %v2242
    %v2314 = vpack.c.b16 %v2283, %v2282
    %v2315 = vpack.c.b16 %v2285, %v2284
    %v2316 = vpack.c.b16 %v2287, %v2286
    %v2317 = vpack.c.b16 %v2289, %v2288
    %v2318 = vpack.c.b16 %v2291, %v2290
    %v2319 = vpack.c.b16 %v2293, %v2292
    %v2320 = vpack.c.b16 %v2295, %v2294
    %v2321 = vpack.c.b16 %v2297, %v2296
    %v2322 = vpack.c.b16 %v2299, %v2298
    %v2323 = vpack.c.b16 %v2301, %v2300
    %v2324 = vpack.c.b16 %v2303, %v2302
    %v2325 = vpack.c.b16 %v2305, %v2304
    %v2326 = vpack.c.b16 %v2307, %v2306
    %v2327 = vpack.c.b16 %v2309, %v2308
    %v2328 = vpack.c.b16 %v2311, %v2310
    %v2329 = vpack.c.b16 %v2313, %v2312
    %2346 = vmatprep.subr.bf16.mxu0 0
    %2347 = vmatpush1.bf16.msra.mxu0 %v2314
    %2348 = vmatprep.subr.bf16.mxu0 0
    %2349 = vmatpush1.bf16.msra.mxu0 %v2315
    %2350 = vmatprep.subr.bf16.mxu0 0
    %2351 = vmatpush1.bf16.msra.mxu0 %v2316
    %2352 = vmatprep.subr.bf16.mxu0 0
    %2353 = vmatpush1.bf16.msra.mxu0 %v2317
    %2354 = vmatprep.subr.bf16.mxu0 0
    %2355 = vmatpush1.bf16.msra.mxu0 %v2318
    %2356 = vmatprep.subr.bf16.mxu0 0
    %2357 = vmatpush1.bf16.msra.mxu0 %v2319
    %2358 = vmatprep.subr.bf16.mxu0 0
    %2359 = vmatpush1.bf16.msra.mxu0 %v2320
    %2360 = vmatprep.subr.bf16.mxu0 0
    %2361 = vmatpush1.bf16.msra.mxu0 %v2321
    %2362 = vmatprep.subr.bf16.mxu0 0
    %2363 = vmatpush1.bf16.msra.mxu0 %v2322
    %2364 = vmatprep.subr.bf16.mxu0 0
    %2365 = vmatpush1.bf16.msra.mxu0 %v2323
    %2366 = vmatprep.subr.bf16.mxu0 0
    %2367 = vmatpush1.bf16.msra.mxu0 %v2324
    %2368 = vmatprep.subr.bf16.mxu0 0
    %2369 = vmatpush1.bf16.msra.mxu0 %v2325
    %2370 = vmatprep.subr.bf16.mxu0 0
    %2371 = vmatpush1.bf16.msra.mxu0 %v2326
    %2372 = vmatprep.subr.bf16.mxu0 0
    %2373 = vmatpush1.bf16.msra.mxu0 %v2327
    %2374 = vmatprep.subr.bf16.mxu0 0
    %2375 = vmatpush1.bf16.msra.mxu0 %v2328
    %2376 = vmatprep.subr.bf16.mxu0 0
    %2377 = vmatpush1.bf16.msra.mxu0 %v2329
    %2378 = vmatprep.mubr.bf16.mxu0 %v2210
    %2379 = vmatmul.mubr.bf16.gmra.mrb[0].mxu0 %v2209
    %v2380 = vpop.f32.mrb[0].mxu0
    %v2381 = vadd.f32 %v2248, %v2380
    %v2382 = vpop.f32.mrb[0].mxu0
    %v2383 = vpop.f32.mrb[0].mxu0
    %v2384 = vadd.f32 %v2248, %v2383
    %v2385 = vpop.f32.mrb[0].mxu0
    %2386 = vdwg.mxu0
    %v2387 = vmax.f32 %v2381, 0.0
    %v2388 = vmax.f32 %v2384, 0.0
    %v2389 = vpack.c.bf16 %v2388, %v2387
    %v2390 = vld [vmem:[#allocation10] sm:$0xf]
    %v2391 = vld [vmem:[#allocation10 + $0x4] sm:$0xf]
    %v2392 = vld [vmem:[#allocation10 + $0x8] sm:$0xf]
    %v2393 = vld [vmem:[#allocation10 + $0xc] sm:$0xf]
    %v2394 = vld [vmem:[#allocation10 + $0x10] sm:$0xf]
    %v2395 = vld [vmem:[#allocation10 + $0x14] sm:$0xf]
    %v2396 = vld [vmem:[#allocation10 + $0x18] sm:$0xf]
    %v2397 = vld [vmem:[#allocation10 + $0x1c] sm:$0xf]
    %v2398 = vld [vmem:[#allocation10 + $0x20] sm:$0xf]
    %v2399 = vld [vmem:[#allocation10 + $0x24] sm:$0xf]
    %v2400 = vld [vmem:[#allocation10 + $0x28] sm:$0xf]
    %v2401 = vld [vmem:[#allocation10 + $0x2c] sm:$0xf]
    %v2402 = vld [vmem:[#allocation10 + $0x30] sm:$0xf]
    %v2403 = vld [vmem:[#allocation10 + $0x34] sm:$0xf]
    %v2404 = vld [vmem:[#allocation10 + $0x38] sm:$0xf]
    %v2405 = vld [vmem:[#allocation10 + $0x3c] sm:$0xf]
    %v2406 = vld [vmem:[%s8] sm:$0x1]
    %v2408 = vlaneseq
    %v2409 = vshrl.u32 %v2408, 7
    %v2410 = vsub.s32 0, %v2409
    %v2411 = vrot.slane %v2406, %v2410
    %v2429 = vunpack.c.l.b16 %v2390
    %v2430 = vunpack.c.l.b16 %v2391
    %v2431 = vunpack.c.l.b16 %v2392
    %v2432 = vunpack.c.l.b16 %v2393
    %v2433 = vunpack.c.l.b16 %v2394
    %v2434 = vunpack.c.l.b16 %v2395
    %v2435 = vunpack.c.l.b16 %v2396
    %v2436 = vunpack.c.l.b16 %v2397
    %v2437 = vunpack.c.l.b16 %v2398
    %v2438 = vunpack.c.l.b16 %v2399
    %v2439 = vunpack.c.l.b16 %v2400
    %v2440 = vunpack.c.l.b16 %v2401
    %v2441 = vunpack.c.l.b16 %v2402
    %v2442 = vunpack.c.l.b16 %v2403
    %v2443 = vunpack.c.l.b16 %v2404
    %v2444 = vunpack.c.l.b16 %v2405
    %v2445 = vpack.c.b16 %v2430, %v2429
    %v2446 = vpack.c.b16 %v2432, %v2431
    %v2447 = vpack.c.b16 %v2434, %v2433
    %v2448 = vpack.c.b16 %v2436, %v2435
    %v2449 = vpack.c.b16 %v2438, %v2437
    %v2450 = vpack.c.b16 %v2440, %v2439
    %v2451 = vpack.c.b16 %v2442, %v2441
    %v2452 = vpack.c.b16 %v2444, %v2443
    %2461 = vmatprep.subr.bf16.mxu0 0
    %2462 = vmatpush1.bf16.msra.mxu0 %v2445
    %2463 = vmatprep.subr.bf16.mxu0 0
    %2464 = vmatpush1.bf16.msra.mxu0 %v2446
    %2465 = vmatprep.subr.bf16.mxu0 0
    %2466 = vmatpush1.bf16.msra.mxu0 %v2447
    %2467 = vmatprep.subr.bf16.mxu0 0
    %2468 = vmatpush1.bf16.msra.mxu0 %v2448
    %2469 = vmatprep.subr.bf16.mxu0 0
    %2470 = vmatpush1.bf16.msra.mxu0 %v2449
    %2471 = vmatprep.subr.bf16.mxu0 0
    %2472 = vmatpush1.bf16.msra.mxu0 %v2450
    %2473 = vmatprep.subr.bf16.mxu0 0
    %2474 = vmatpush1.bf16.msra.mxu0 %v2451
    %2475 = vmatprep.subr.bf16.mxu0 0
    %2476 = vmatpush1.bf16.msra.mxu0 %v2452
    %2477 = vmatprep.subr.bf16.mxu0 0
    %2478 = vmatpush1.bf16.msra.mxu0 0
    %2479 = vmatprep.subr.bf16.mxu0 0
    %2480 = vmatpush1.bf16.msra.mxu0 0
    %2481 = vmatprep.subr.bf16.mxu0 0
    %2482 = vmatpush1.bf16.msra.mxu0 0
    %2483 = vmatprep.subr.bf16.mxu0 0
    %2484 = vmatpush1.bf16.msra.mxu0 0
    %2485 = vmatprep.subr.bf16.mxu0 0
    %2486 = vmatpush1.bf16.msra.mxu0 0
    %2487 = vmatprep.subr.bf16.mxu0 0
    %2488 = vmatpush1.bf16.msra.mxu0 0
    %2489 = vmatprep.subr.bf16.mxu0 0
    %2490 = vmatpush1.bf16.msra.mxu0 0
    %2491 = vmatprep.subr.bf16.mxu0 0
    %2492 = vmatpush1.bf16.msra.mxu0 0
    %2493 = vmatprep.mubr.bf16.mxu0 0
    %2494 = vmatmul.mubr.bf16.gmra.mrb[0].mxu0 %v2389
    %v2495 = vpop.f32.mrb[0].mxu0
    %v2496 = vadd.f32 %v2411, %v2495
    %v2497 = vpop.f32.mrb[0].mxu0
    %v2498 = vpop.f32.mrb[0].mxu0
    %v2499 = vadd.f32 %v2411, %v2498
    %v2500 = vpop.f32.mrb[0].mxu0
    %2501 = vdwg.mxu0
    %v2502 = vmax.f32 %v2496, 0.0
    %v2503 = vmax.f32 %v2499, 0.0
    %v2504 = vpack.c.bf16 %v2503, %v2502
    %v2505 = vld [vmem:[#allocation11] sm:$0xf]
    %v2506 = vld [vmem:[#allocation11 + $0x4] sm:$0xf]
    %v2507 = vld [vmem:[#allocation11 + $0x8] sm:$0xf]
    %v2508 = vld [vmem:[#allocation11 + $0xc] sm:$0xf]
    %v2509 = vld [vmem:[#allocation11 + $0x10] sm:$0xf]
    %v2510 = vld [vmem:[#allocation11 + $0x14] sm:$0xf]
    %v2511 = vld [vmem:[#allocation11 + $0x18] sm:$0xf]
    %v2512 = vld [vmem:[#allocation11 + $0x1c] sm:$0xf]
    %v2513 = vld [vmem:[#allocation11 + $0x20] sm:$0xf]
    %v2514 = vld [vmem:[#allocation11 + $0x24] sm:$0xf]
    %v2515 = vld [vmem:[#allocation11 + $0x28] sm:$0xf]
    %v2516 = vld [vmem:[#allocation11 + $0x2c] sm:$0xf]
    %v2517 = vld [vmem:[#allocation11 + $0x30] sm:$0xf]
    %v2518 = vld [vmem:[#allocation11 + $0x34] sm:$0xf]
    %v2519 = vld [vmem:[#allocation11 + $0x38] sm:$0xf]
    %v2520 = vld [vmem:[#allocation11 + $0x3c] sm:$0xf]
    %v2521 = vld [vmem:[%s10] sm:$0x1]
    %v2523 = vlaneseq
    %v2524 = vshrl.u32 %v2523, 7
    %v2525 = vsub.s32 0, %v2524
    %v2526 = vrot.slane %v2521, %v2525
    %v2544 = vunpack.c.l.b16 %v2505
    %v2545 = vunpack.c.l.b16 %v2506
    %v2546 = vunpack.c.l.b16 %v2507
    %v2547 = vunpack.c.l.b16 %v2508
    %v2548 = vunpack.c.l.b16 %v2509
    %v2549 = vunpack.c.l.b16 %v2510
    %v2550 = vunpack.c.l.b16 %v2511
    %v2551 = vunpack.c.l.b16 %v2512
    %v2552 = vunpack.c.l.b16 %v2513
    %v2553 = vunpack.c.l.b16 %v2514
    %v2554 = vunpack.c.l.b16 %v2515
    %v2555 = vunpack.c.l.b16 %v2516
    %v2556 = vunpack.c.l.b16 %v2517
    %v2557 = vunpack.c.l.b16 %v2518
    %v2558 = vunpack.c.l.b16 %v2519
    %v2559 = vunpack.c.l.b16 %v2520
    %v2560 = vpack.c.b16 %v2545, %v2544
    %v2561 = vpack.c.b16 %v2547, %v2546
    %v2562 = vpack.c.b16 %v2549, %v2548
    %v2563 = vpack.c.b16 %v2551, %v2550
    %v2564 = vpack.c.b16 %v2553, %v2552
    %v2565 = vpack.c.b16 %v2555, %v2554
    %v2566 = vpack.c.b16 %v2557, %v2556
    %v2567 = vpack.c.b16 %v2559, %v2558
    %2576 = vmatprep.subr.bf16.mxu0 0
    %2577 = vmatpush1.bf16.msra.mxu0 %v2560
    %2578 = vmatprep.subr.bf16.mxu0 0
    %2579 = vmatpush1.bf16.msra.mxu0 %v2561
    %2580 = vmatprep.subr.bf16.mxu0 0
    %2581 = vmatpush1.bf16.msra.mxu0 %v2562
    %2582 = vmatprep.subr.bf16.mxu0 0
    %2583 = vmatpush1.bf16.msra.mxu0 %v2563
    %2584 = vmatprep.subr.bf16.mxu0 0
    %2585 = vmatpush1.bf16.msra.mxu0 %v2564
    %2586 = vmatprep.subr.bf16.mxu0 0
    %2587 = vmatpush1.bf16.msra.mxu0 %v2565
    %2588 = vmatprep.subr.bf16.mxu0 0
    %2589 = vmatpush1.bf16.msra.mxu0 %v2566
    %2590 = vmatprep.subr.bf16.mxu0 0
    %2591 = vmatpush1.bf16.msra.mxu0 %v2567
    %2592 = vmatprep.subr.bf16.mxu0 0
    %2593 = vmatpush1.bf16.msra.mxu0 0
    %2594 = vmatprep.subr.bf16.mxu0 0
    %2595 = vmatpush1.bf16.msra.mxu0 0
    %2596 = vmatprep.subr.bf16.mxu0 0
    %2597 = vmatpush1.bf16.msra.mxu0 0
    %2598 = vmatprep.subr.bf16.mxu0 0
    %2599 = vmatpush1.bf16.msra.mxu0 0
    %2600 = vmatprep.subr.bf16.mxu0 0
    %2601 = vmatpush1.bf16.msra.mxu0 0
    %2602 = vmatprep.subr.bf16.mxu0 0
    %2603 = vmatpush1.bf16.msra.mxu0 0
    %2604 = vmatprep.subr.bf16.mxu0 0
    %2605 = vmatpush1.bf16.msra.mxu0 0
    %2606 = vmatprep.subr.bf16.mxu0 0
    %2607 = vmatpush1.bf16.msra.mxu0 0
    %2608 = vmatprep.mubr.bf16.mxu0 0
    %2609 = vmatmul.mubr.bf16.gmra.mrb[0].mxu0 %v2504
    %v2610 = vpop.f32.mrb[0].mxu0
    %v2611 = vadd.f32 %v2526, %v2610
    %v2612 = vpop.f32.mrb[0].mxu0
    %v2613 = vpop.f32.mrb[0].mxu0
    %v2614 = vadd.f32 %v2526, %v2613
    %v2615 = vpop.f32.mrb[0].mxu0
    %2616 = vdwg.mxu0
    %v2617 = vpack.c.bf16 %v2614, %v2611
    %v2619 = vunpack.c.l.b16 %v2617
    %v2620 = vunpack.c.h.b16 %v2617
    %v2621 = vpack.c.b16 %v2619, %v2619
    %v2622 = vpack.c.b16 %v2620, %v2620
    %2625 = vst [vmem:[#allocation13] sm:$0xf] %v2621
    %2626 = vst [vmem:[#allocation13 + $0x4] sm:$0xf] %v2622
    // Predicated region
    $region70: #{tpu_custom_call.1} parent=1 // pred_check
      _
    $region71: #{tpu_custom_call.1} parent=1 // pred_check_branch
      %2628 = sbr.rel (0) target = $region73
    $region72: #{tpu_custom_call.1} parent=1 // pred_region
      %s2630 = ssub.s32 128, 128
      %2631 = vsyncadd [#allocation4], %s2630
      %s2632 = sshll.u32 [#allocation13], 4
      %s2633 = int_to_ptr.vmem [resolvable:$true] %s2632
      %2638 = dma.vmem_to_hbm [thread:$0]  %s2633, 128, %s11, [#allocation4], 64, 64, 4
    $region73: #{tpu_custom_call.1} parent=1 // pred_fallthru
      _
    // Predicated region
    $region74: #{tpu_custom_call.1} parent=1 // pred_check
      _
    $region75: #{tpu_custom_call.1} parent=1 // pred_check_branch
      %2640 = sbr.rel (0) target = $region77
    $region76: #{tpu_custom_call.1} parent=1 // pred_region
      %2641 = dma.done [#allocation4], 128
    $region77: #{tpu_custom_call.1} parent=1 // pred_fallthru
      _
    %2642 = vsyncpa [#allocation3], 1
    %2643 = vsyncpa [#allocation6], 1
    %2644 = vsyncpa [#allocation9], 1
    %2645 = vsyncpa [#allocation12], 1
    %2646 = vsyncpa [#allocation4], 1

</llo_original>
